<compile_context>
chip_gen: v5e
topology: v5e:2x2
jax: 0.10.0
libtpu: 0.0.40
codegen_flags: <defaults>
</compile_context>

<pallas_src>
import functools

import jax
import jax.numpy as jnp
from jax.experimental import pallas as pl
from jax.experimental.pallas import tpu as pltpu


LANE = 128


def _round_up(n, m):
    return ((n + m - 1) // m) * m


# ----------------------------------------------------------------------------
# Shared math — used by the Pallas kernel (reading VMEM refs lazily) and by
# the pure-JAX reference.  bf16 matmul operands, f32 MXU accumulation, f32
# epilogues (bias/relu/sums); each array is cast to bf16 exactly once.
# Canonical weight/bias index order (15 leaves):
#   HLA4(block1): [0] conv1 [1] conv2 [2] lin | [3] conv1 [4] conv2 [5] lin | [6] lin
#   HLA4(block2): [7..13] same layout           | [14] top-level lin
# ----------------------------------------------------------------------------

def _hla8_math(a_bf, x_bf, get_w, get_b, in_pad, hid_pad):
    def mm(l_bf, r_bf):
        return jnp.dot(l_bf, r_bf, preferred_element_type=jnp.float32)

    def conv(x_b, idx, ip, op):
        # GCN-style conv stand-in: relu(A_hat @ x @ W + b).
        # Static matmul-order choice on PADDED dims.
        w = get_w(idx)
        if ip <= op:
            z = mm(mm(a_bf, x_b).astype(jnp.bfloat16), w)
        else:
            z = mm(a_bf, mm(x_b, w).astype(jnp.bfloat16))
        return jnp.maximum(z + get_b(idx), 0.0)                    # f32

    def block(x_b, base, ip):
        # Block (mode='sum', num_layers=2): conv1 -> conv2 -> (h1+h2) @ W + b
        h1 = conv(x_b, base + 0, ip, hid_pad)                      # f32
        h2 = conv(h1.astype(jnp.bfloat16), base + 1, hid_pad, hid_pad)
        s_bf = (h1 + h2).astype(jnp.bfloat16)                      # f32 sum, one cast
        return mm(s_bf, get_w(base + 2)) + get_b(base + 2)         # f32, no relu

    def hla4(x_b, base, ip):
        # BlockHLA4: relu(block1), relu(block2), sum, linear
        h1 = jnp.maximum(block(x_b, base + 0, ip), 0.0)
        h2 = jnp.maximum(block(h1.astype(jnp.bfloat16), base + 3, hid_pad), 0.0)
        s_bf = (h1 + h2).astype(jnp.bfloat16)
        return mm(s_bf, get_w(base + 6)) + get_b(base + 6)

    # BlockHLA8: relu(block1), block2 (NO relu), sum, linear
    h1 = jnp.maximum(hla4(x_bf, 0, in_pad), 0.0)
    h2 = hla4(h1.astype(jnp.bfloat16), 7, hid_pad)
    s_bf = (h1 + h2).astype(jnp.bfloat16)
    return mm(s_bf, get_w(14)) + get_b(14)


# ----------------------------------------------------------------------------
# Fused Pallas kernel: whole BlockHLA8 forward in one call, everything VMEM.
# ----------------------------------------------------------------------------

def _hla8_kernel(in_pad, hid_pad, a_ref, x_ref, w_ref, b_ref, o_ref):
    a_bf = a_ref[...]                       # bf16, loaded/used once, reused by all 8 convs
    x_bf = x_ref[...]                       # bf16
    o_ref[...] = _hla8_math(
        a_bf, x_bf,
        lambda i: w_ref[i],                 # lazy (128,128) bf16 slab at point of use
        lambda i: b_ref[i],                 # (1,128) f32 bias
        in_pad, hid_pad)


def _flatten_hla8_params(p):
    def block_leaves(bp):
        return ([bp["conv1_w"], bp["conv2_w"], bp["lin_w"]],
                [bp["conv1_b"], bp["conv2_b"], bp["lin_b"]])

    def hla4_leaves(hp):
        w1, b1 = block_leaves(hp["block1"])
        w2, b2 = block_leaves(hp["block2"])
        return (w1 + w2 + [hp["lin_w"]], b1 + b2 + [hp["lin_b"]])

    w1, b1 = hla4_leaves(p["block1"])
    w2, b2 = hla4_leaves(p["block2"])
    return (w1 + w2 + [p["lin_w"]], b1 + b2 + [p["lin_b"]])


def block_hla8_pallas(params, x, a_hat, in_dim, hidden_dim, out_dim):
    n = x.shape[0]
    n_pad = _round_up(n, LANE)                       # node dim sits on A_hat's lane axis
    in_pad = _round_up(in_dim, LANE)
    hid_pad = _round_up(hidden_dim, LANE)
    out_pad = _round_up(out_dim, LANE)
    d_max = max(in_pad, hid_pad, out_pad)            # uniform padded feature width

    # Host-side padding + bf16 cast of matmul operands (zero padding is inert:
    # zero A rows/cols, zero weight rows/cols, zero bias cols).
    a_p = jnp.zeros((n_pad, n_pad), jnp.bfloat16).at[:n, :n].set(
        a_hat.astype(jnp.bfloat16))
    x_p = jnp.zeros((n_pad, d_max), jnp.bfloat16).at[:n, :in_dim].set(
        x.astype(jnp.bfloat16))

    w_list, b_list = _flatten_hla8_params(params)
    w_stack = jnp.stack([
        jnp.zeros((d_max, d_max), jnp.bfloat16)
        .at[: w.shape[0], : w.shape[1]].set(w.astype(jnp.bfloat16))
        for w in w_list])                             # (15, 128, 128) bf16
    b_stack = jnp.stack([
        jnp.zeros((1, d_max), jnp.float32).at[:, : b.shape[1]].set(b)
        for b in b_list])                             # (15, 1, 128) f32

    # Advisory cost estimate for the fused custom call.
    mm_flops = (8 * 2 * (n_pad * n_pad * d_max + n_pad * d_max * d_max)
                + 7 * 2 * n_pad * d_max * d_max)
    bytes_acc = (a_p.size + x_p.size + w_stack.size) * 2 \
        + b_stack.size * 4 + n_pad * d_max * 4

    vmem = pl.BlockSpec(memory_space=pltpu.MemorySpace.VMEM)
    kernel = functools.partial(_hla8_kernel, in_pad, hid_pad)
    out_p = pl.pallas_call(
        kernel,
        out_shape=jax.ShapeDtypeStruct((n_pad, d_max), jnp.float32),
        in_specs=[vmem, vmem, vmem, vmem],
        out_specs=vmem,
        compiler_params=pltpu.CompilerParams(vmem_limit_bytes=64 * 1024 * 1024),
        cost_estimate=pl.CostEstimate(
            flops=mm_flops, transcendentals=0, bytes_accessed=bytes_acc),
    )(a_p, x_p, w_stack, b_stack)
    return out_p[:n, :out_dim]


# ----------------------------------------------------------------------------
# Deterministic parameter init (glorot weights, zero lin biases)
# ----------------------------------------------------------------------------

def _glorot(key, fan_in, fan_out):
    limit = (6.0 / (fan_in + fan_out)) ** 0.5
    return jax.random.uniform(key, (fan_in, fan_out), jnp.float32, -limit, limit)


def _init_block(key, in_dim, hidden_dim, out_dim):
    k1, k2, k3, k4, k5 = jax.random.split(key, 5)
    bound1 = 1.0 / (in_dim ** 0.5)
    bound2 = 1.0 / (hidden_dim ** 0.5)
    return {
        "conv1_w": _glorot(k1, in_dim, hidden_dim),
        "conv1_b": jax.random.uniform(k2, (1, hidden_dim), jnp.float32, -bound1, bound1),
        "conv2_w": _glorot(k3, hidden_dim, hidden_dim),
        "conv2_b": jax.random.uniform(k4, (1, hidden_dim), jnp.float32, -bound2, bound2),
        "lin_w": _glorot(k5, hidden_dim, out_dim),
        "lin_b": jnp.zeros((1, out_dim), jnp.float32),
    }


def _init_hla4(key, in_dim, hidden_dim, out_dim):
    k1, k2, k3 = jax.random.split(key, 3)
    return {
        "block1": _init_block(k1, in_dim, hidden_dim, hidden_dim),
        "block2": _init_block(k2, hidden_dim, hidden_dim, hidden_dim),
        "lin_w": _glorot(k3, hidden_dim, out_dim),
        "lin_b": jnp.zeros((1, out_dim), jnp.float32),
    }


def init_hla8(key, in_dim, hidden_dim, out_dim):
    k1, k2, k3 = jax.random.split(key, 3)
    return {
        "block1": _init_hla4(k1, in_dim, hidden_dim, hidden_dim),
        "block2": _init_hla4(k2, hidden_dim, hidden_dim, hidden_dim),
        "lin_w": _glorot(k3, hidden_dim, out_dim),
        "lin_b": jnp.zeros((1, out_dim), jnp.float32),
    }


# ----------------------------------------------------------------------------
# Graph glue: dense symmetric-normalized adjacency from edge_index
# ----------------------------------------------------------------------------

def normalized_adjacency(edge_index, num_nodes):
    src, dst = edge_index[0], edge_index[1]
    a = jnp.zeros((num_nodes, num_nodes), jnp.float32).at[dst, src].set(1.0)
    diag = jnp.arange(num_nodes)
    a = a.at[diag, diag].set(1.0)          # self-loops exactly once (A+I semantics)
    deg = a.sum(axis=1)
    d_inv_sqrt = 1.0 / jnp.sqrt(jnp.maximum(deg, 1.0))
    return d_inv_sqrt[:, None] * a * d_inv_sqrt[None, :]


# ----------------------------------------------------------------------------
if __name__ == "__main__":
    N, E = 16, 32          # nodes, edges
    IN_DIM, HIDDEN_DIM, OUT_DIM = 8, 32, 4

    key = jax.random.PRNGKey(0)
    kx, ke, kp = jax.random.split(key, 3)

    x = jax.random.normal(kx, (N, IN_DIM), jnp.float32)
    edge_index = jax.random.randint(ke, (2, E), 0, N, jnp.int32)
    params = init_hla8(kp, IN_DIM, HIDDEN_DIM, OUT_DIM)

    a_hat = normalized_adjacency(edge_index, N)

    fwd = jax.jit(block_hla8_pallas, static_argnums=(3, 4, 5))
    out = fwd(params, x, a_hat, IN_DIM, HIDDEN_DIM, OUT_DIM)
    jax.block_until_ready(out)

    # Pure-JAX reference on the UNPADDED arrays, same bf16/f32 math and same
    # cast placement as the kernel.
    w_list, b_list = _flatten_hla8_params(params)
    ref = _hla8_math(
        a_hat.astype(jnp.bfloat16), x.astype(jnp.bfloat16),
        lambda i: w_list[i].astype(jnp.bfloat16),
        lambda i: b_list[i],
        _round_up(IN_DIM, LANE), _round_up(HIDDEN_DIM, LANE))

    assert out.shape == (N, OUT_DIM)
    assert bool(jnp.allclose(out, ref, atol=2e-2, rtol=2e-2)), (
        float(jnp.max(jnp.abs(out - ref))))

    print("KERNEL_OK")
</pallas_src>

<mosaic_0001>
module attributes {stable_mosaic.version = 11 : i64} {
  func.func @_hla8_kernel(%arg0: memref<128x128xbf16, #tpu.memory_space<vmem>>, %arg1: memref<128x128xbf16, #tpu.memory_space<vmem>>, %arg2: memref<15x128x128xbf16, #tpu.memory_space<vmem>>, %arg3: memref<15x1x128xf32, #tpu.memory_space<vmem>>, %arg4: memref<128x128xf32, #tpu.memory_space<vmem>>) attributes {dimension_semantics = [], scalar_prefetch = 0 : i64, scratch_operands = 0 : i64, tpu.core_type = #tpu.core_type<tc>} {
    %c0 = arith.constant 0 : index
    %c0_0 = arith.constant 0 : index
    %0 = vector.load %arg0[%c0, %c0_0] : memref<128x128xbf16, #tpu.memory_space<vmem>>, vector<128x128xbf16>
    %c0_1 = arith.constant 0 : index
    %c0_2 = arith.constant 0 : index
    %1 = vector.load %arg1[%c0_1, %c0_2] : memref<128x128xbf16, #tpu.memory_space<vmem>>, vector<128x128xbf16>
    %c0_3 = arith.constant 0 : index
    %c0_4 = arith.constant 0 : index
    %c0_5 = arith.constant 0 : index
    %2 = vector.load %arg2[%c0_3, %c0_4, %c0_5] : memref<15x128x128xbf16, #tpu.memory_space<vmem>>, vector<1x128x128xbf16>
    %3 = vector.shape_cast %2 : vector<1x128x128xbf16> to vector<128x128xbf16>
    %cst = arith.constant dense<0.000000e+00> : vector<128x128xf32>
    %4 = tpu.matmul %0, %1, %cst {dimension_numbers = #tpu.dot_dimension_numbers<[1], [0], [0], [1], [0, 0, 1, 1], [], []>} : vector<128x128xbf16>, vector<128x128xbf16>, vector<128x128xf32> -> vector<128x128xf32>
    %5 = arith.truncf %4 : vector<128x128xf32> to vector<128x128xbf16>
    %cst_6 = arith.constant dense<0.000000e+00> : vector<128x128xf32>
    %6 = tpu.matmul %5, %3, %cst_6 {dimension_numbers = #tpu.dot_dimension_numbers<[1], [0], [0], [1], [0, 0, 1, 1], [], []>} : vector<128x128xbf16>, vector<128x128xbf16>, vector<128x128xf32> -> vector<128x128xf32>
    %c0_7 = arith.constant 0 : index
    %c0_8 = arith.constant 0 : index
    %c0_9 = arith.constant 0 : index
    %7 = vector.load %arg3[%c0_7, %c0_8, %c0_9] : memref<15x1x128xf32, #tpu.memory_space<vmem>>, vector<1x1x128xf32>
    %8 = vector.shape_cast %7 : vector<1x1x128xf32> to vector<1x128xf32>
    %9 = vector.broadcast %8 : vector<1x128xf32> to vector<128x128xf32>
    %10 = arith.addf %6, %9 : vector<128x128xf32>
    %cst_10 = arith.constant 0.000000e+00 : f32
    %11 = vector.broadcast %cst_10 : f32 to vector<128x128xf32>
    %12 = arith.maximumf %10, %11 : vector<128x128xf32>
    %13 = arith.truncf %12 : vector<128x128xf32> to vector<128x128xbf16>
    %c1 = arith.constant 1 : index
    %c0_11 = arith.constant 0 : index
    %c0_12 = arith.constant 0 : index
    %14 = vector.load %arg2[%c1, %c0_11, %c0_12] : memref<15x128x128xbf16, #tpu.memory_space<vmem>>, vector<1x128x128xbf16>
    %15 = vector.shape_cast %14 : vector<1x128x128xbf16> to vector<128x128xbf16>
    %cst_13 = arith.constant dense<0.000000e+00> : vector<128x128xf32>
    %16 = tpu.matmul %0, %13, %cst_13 {dimension_numbers = #tpu.dot_dimension_numbers<[1], [0], [0], [1], [0, 0, 1, 1], [], []>} : vector<128x128xbf16>, vector<128x128xbf16>, vector<128x128xf32> -> vector<128x128xf32>
    %17 = arith.truncf %16 : vector<128x128xf32> to vector<128x128xbf16>
    %cst_14 = arith.constant dense<0.000000e+00> : vector<128x128xf32>
    %18 = tpu.matmul %17, %15, %cst_14 {dimension_numbers = #tpu.dot_dimension_numbers<[1], [0], [0], [1], [0, 0, 1, 1], [], []>} : vector<128x128xbf16>, vector<128x128xbf16>, vector<128x128xf32> -> vector<128x128xf32>
    %c1_15 = arith.constant 1 : index
    %c0_16 = arith.constant 0 : index
    %c0_17 = arith.constant 0 : index
    %19 = vector.load %arg3[%c1_15, %c0_16, %c0_17] : memref<15x1x128xf32, #tpu.memory_space<vmem>>, vector<1x1x128xf32>
    %20 = vector.shape_cast %19 : vector<1x1x128xf32> to vector<1x128xf32>
    %21 = vector.broadcast %20 : vector<1x128xf32> to vector<128x128xf32>
    %22 = arith.addf %18, %21 : vector<128x128xf32>
    %cst_18 = arith.constant 0.000000e+00 : f32
    %23 = vector.broadcast %cst_18 : f32 to vector<128x128xf32>
    %24 = arith.maximumf %22, %23 : vector<128x128xf32>
    %25 = arith.addf %12, %24 : vector<128x128xf32>
    %26 = arith.truncf %25 : vector<128x128xf32> to vector<128x128xbf16>
    %c2 = arith.constant 2 : index
    %c0_19 = arith.constant 0 : index
    %c0_20 = arith.constant 0 : index
    %27 = vector.load %arg2[%c2, %c0_19, %c0_20] : memref<15x128x128xbf16, #tpu.memory_space<vmem>>, vector<1x128x128xbf16>
    %28 = vector.shape_cast %27 : vector<1x128x128xbf16> to vector<128x128xbf16>
    %cst_21 = arith.constant dense<0.000000e+00> : vector<128x128xf32>
    %29 = tpu.matmul %26, %28, %cst_21 {dimension_numbers = #tpu.dot_dimension_numbers<[1], [0], [0], [1], [0, 0, 1, 1], [], []>} : vector<128x128xbf16>, vector<128x128xbf16>, vector<128x128xf32> -> vector<128x128xf32>
    %c2_22 = arith.constant 2 : index
    %c0_23 = arith.constant 0 : index
    %c0_24 = arith.constant 0 : index
    %30 = vector.load %arg3[%c2_22, %c0_23, %c0_24] : memref<15x1x128xf32, #tpu.memory_space<vmem>>, vector<1x1x128xf32>
    %31 = vector.shape_cast %30 : vector<1x1x128xf32> to vector<1x128xf32>
    %32 = vector.broadcast %31 : vector<1x128xf32> to vector<128x128xf32>
    %33 = arith.addf %29, %32 : vector<128x128xf32>
    %cst_25 = arith.constant 0.000000e+00 : f32
    %34 = vector.broadcast %cst_25 : f32 to vector<128x128xf32>
    %35 = arith.maximumf %33, %34 : vector<128x128xf32>
    %36 = arith.truncf %35 : vector<128x128xf32> to vector<128x128xbf16>
    %c3 = arith.constant 3 : index
    %c0_26 = arith.constant 0 : index
    %c0_27 = arith.constant 0 : index
    %37 = vector.load %arg2[%c3, %c0_26, %c0_27] : memref<15x128x128xbf16, #tpu.memory_space<vmem>>, vector<1x128x128xbf16>
    %38 = vector.shape_cast %37 : vector<1x128x128xbf16> to vector<128x128xbf16>
    %cst_28 = arith.constant dense<0.000000e+00> : vector<128x128xf32>
    %39 = tpu.matmul %0, %36, %cst_28 {dimension_numbers = #tpu.dot_dimension_numbers<[1], [0], [0], [1], [0, 0, 1, 1], [], []>} : vector<128x128xbf16>, vector<128x128xbf16>, vector<128x128xf32> -> vector<128x128xf32>
    %40 = arith.truncf %39 : vector<128x128xf32> to vector<128x128xbf16>
    %cst_29 = arith.constant dense<0.000000e+00> : vector<128x128xf32>
    %41 = tpu.matmul %40, %38, %cst_29 {dimension_numbers = #tpu.dot_dimension_numbers<[1], [0], [0], [1], [0, 0, 1, 1], [], []>} : vector<128x128xbf16>, vector<128x128xbf16>, vector<128x128xf32> -> vector<128x128xf32>
    %c3_30 = arith.constant 3 : index
    %c0_31 = arith.constant 0 : index
    %c0_32 = arith.constant 0 : index
    %42 = vector.load %arg3[%c3_30, %c0_31, %c0_32] : memref<15x1x128xf32, #tpu.memory_space<vmem>>, vector<1x1x128xf32>
    %43 = vector.shape_cast %42 : vector<1x1x128xf32> to vector<1x128xf32>
    %44 = vector.broadcast %43 : vector<1x128xf32> to vector<128x128xf32>
    %45 = arith.addf %41, %44 : vector<128x128xf32>
    %cst_33 = arith.constant 0.000000e+00 : f32
    %46 = vector.broadcast %cst_33 : f32 to vector<128x128xf32>
    %47 = arith.maximumf %45, %46 : vector<128x128xf32>
    %48 = arith.truncf %47 : vector<128x128xf32> to vector<128x128xbf16>
    %c4 = arith.constant 4 : index
    %c0_34 = arith.constant 0 : index
    %c0_35 = arith.constant 0 : index
    %49 = vector.load %arg2[%c4, %c0_34, %c0_35] : memref<15x128x128xbf16, #tpu.memory_space<vmem>>, vector<1x128x128xbf16>
    %50 = vector.shape_cast %49 : vector<1x128x128xbf16> to vector<128x128xbf16>
    %cst_36 = arith.constant dense<0.000000e+00> : vector<128x128xf32>
    %51 = tpu.matmul %0, %48, %cst_36 {dimension_numbers = #tpu.dot_dimension_numbers<[1], [0], [0], [1], [0, 0, 1, 1], [], []>} : vector<128x128xbf16>, vector<128x128xbf16>, vector<128x128xf32> -> vector<128x128xf32>
    %52 = arith.truncf %51 : vector<128x128xf32> to vector<128x128xbf16>
    %cst_37 = arith.constant dense<0.000000e+00> : vector<128x128xf32>
    %53 = tpu.matmul %52, %50, %cst_37 {dimension_numbers = #tpu.dot_dimension_numbers<[1], [0], [0], [1], [0, 0, 1, 1], [], []>} : vector<128x128xbf16>, vector<128x128xbf16>, vector<128x128xf32> -> vector<128x128xf32>
    %c4_38 = arith.constant 4 : index
    %c0_39 = arith.constant 0 : index
    %c0_40 = arith.constant 0 : index
    %54 = vector.load %arg3[%c4_38, %c0_39, %c0_40] : memref<15x1x128xf32, #tpu.memory_space<vmem>>, vector<1x1x128xf32>
    %55 = vector.shape_cast %54 : vector<1x1x128xf32> to vector<1x128xf32>
    %56 = vector.broadcast %55 : vector<1x128xf32> to vector<128x128xf32>
    %57 = arith.addf %53, %56 : vector<128x128xf32>
    %cst_41 = arith.constant 0.000000e+00 : f32
    %58 = vector.broadcast %cst_41 : f32 to vector<128x128xf32>
    %59 = arith.maximumf %57, %58 : vector<128x128xf32>
    %60 = arith.addf %47, %59 : vector<128x128xf32>
    %61 = arith.truncf %60 : vector<128x128xf32> to vector<128x128xbf16>
    %c5 = arith.constant 5 : index
    %c0_42 = arith.constant 0 : index
    %c0_43 = arith.constant 0 : index
    %62 = vector.load %arg2[%c5, %c0_42, %c0_43] : memref<15x128x128xbf16, #tpu.memory_space<vmem>>, vector<1x128x128xbf16>
    %63 = vector.shape_cast %62 : vector<1x128x128xbf16> to vector<128x128xbf16>
    %cst_44 = arith.constant dense<0.000000e+00> : vector<128x128xf32>
    %64 = tpu.matmul %61, %63, %cst_44 {dimension_numbers = #tpu.dot_dimension_numbers<[1], [0], [0], [1], [0, 0, 1, 1], [], []>} : vector<128x128xbf16>, vector<128x128xbf16>, vector<128x128xf32> -> vector<128x128xf32>
    %c5_45 = arith.constant 5 : index
    %c0_46 = arith.constant 0 : index
    %c0_47 = arith.constant 0 : index
    %65 = vector.load %arg3[%c5_45, %c0_46, %c0_47] : memref<15x1x128xf32, #tpu.memory_space<vmem>>, vector<1x1x128xf32>
    %66 = vector.shape_cast %65 : vector<1x1x128xf32> to vector<1x128xf32>
    %67 = vector.broadcast %66 : vector<1x128xf32> to vector<128x128xf32>
    %68 = arith.addf %64, %67 : vector<128x128xf32>
    %cst_48 = arith.constant 0.000000e+00 : f32
    %69 = vector.broadcast %cst_48 : f32 to vector<128x128xf32>
    %70 = arith.maximumf %68, %69 : vector<128x128xf32>
    %71 = arith.addf %35, %70 : vector<128x128xf32>
    %72 = arith.truncf %71 : vector<128x128xf32> to vector<128x128xbf16>
    %c6 = arith.constant 6 : index
    %c0_49 = arith.constant 0 : index
    %c0_50 = arith.constant 0 : index
    %73 = vector.load %arg2[%c6, %c0_49, %c0_50] : memref<15x128x128xbf16, #tpu.memory_space<vmem>>, vector<1x128x128xbf16>
    %74 = vector.shape_cast %73 : vector<1x128x128xbf16> to vector<128x128xbf16>
    %cst_51 = arith.constant dense<0.000000e+00> : vector<128x128xf32>
    %75 = tpu.matmul %72, %74, %cst_51 {dimension_numbers = #tpu.dot_dimension_numbers<[1], [0], [0], [1], [0, 0, 1, 1], [], []>} : vector<128x128xbf16>, vector<128x128xbf16>, vector<128x128xf32> -> vector<128x128xf32>
    %c6_52 = arith.constant 6 : index
    %c0_53 = arith.constant 0 : index
    %c0_54 = arith.constant 0 : index
    %76 = vector.load %arg3[%c6_52, %c0_53, %c0_54] : memref<15x1x128xf32, #tpu.memory_space<vmem>>, vector<1x1x128xf32>
    %77 = vector.shape_cast %76 : vector<1x1x128xf32> to vector<1x128xf32>
    %78 = vector.broadcast %77 : vector<1x128xf32> to vector<128x128xf32>
    %79 = arith.addf %75, %78 : vector<128x128xf32>
    %cst_55 = arith.constant 0.000000e+00 : f32
    %80 = vector.broadcast %cst_55 : f32 to vector<128x128xf32>
    %81 = arith.maximumf %79, %80 : vector<128x128xf32>
    %82 = arith.truncf %81 : vector<128x128xf32> to vector<128x128xbf16>
    %c7 = arith.constant 7 : index
    %c0_56 = arith.constant 0 : index
    %c0_57 = arith.constant 0 : index
    %83 = vector.load %arg2[%c7, %c0_56, %c0_57] : memref<15x128x128xbf16, #tpu.memory_space<vmem>>, vector<1x128x128xbf16>
    %84 = vector.shape_cast %83 : vector<1x128x128xbf16> to vector<128x128xbf16>
    %cst_58 = arith.constant dense<0.000000e+00> : vector<128x128xf32>
    %85 = tpu.matmul %0, %82, %cst_58 {dimension_numbers = #tpu.dot_dimension_numbers<[1], [0], [0], [1], [0, 0, 1, 1], [], []>} : vector<128x128xbf16>, vector<128x128xbf16>, vector<128x128xf32> -> vector<128x128xf32>
    %86 = arith.truncf %85 : vector<128x128xf32> to vector<128x128xbf16>
    %cst_59 = arith.constant dense<0.000000e+00> : vector<128x128xf32>
    %87 = tpu.matmul %86, %84, %cst_59 {dimension_numbers = #tpu.dot_dimension_numbers<[1], [0], [0], [1], [0, 0, 1, 1], [], []>} : vector<128x128xbf16>, vector<128x128xbf16>, vector<128x128xf32> -> vector<128x128xf32>
    %c7_60 = arith.constant 7 : index
    %c0_61 = arith.constant 0 : index
    %c0_62 = arith.constant 0 : index
    %88 = vector.load %arg3[%c7_60, %c0_61, %c0_62] : memref<15x1x128xf32, #tpu.memory_space<vmem>>, vector<1x1x128xf32>
    %89 = vector.shape_cast %88 : vector<1x1x128xf32> to vector<1x128xf32>
    %90 = vector.broadcast %89 : vector<1x128xf32> to vector<128x128xf32>
    %91 = arith.addf %87, %90 : vector<128x128xf32>
    %cst_63 = arith.constant 0.000000e+00 : f32
    %92 = vector.broadcast %cst_63 : f32 to vector<128x128xf32>
    %93 = arith.maximumf %91, %92 : vector<128x128xf32>
    %94 = arith.truncf %93 : vector<128x128xf32> to vector<128x128xbf16>
    %c8 = arith.constant 8 : index
    %c0_64 = arith.constant 0 : index
    %c0_65 = arith.constant 0 : index
    %95 = vector.load %arg2[%c8, %c0_64, %c0_65] : memref<15x128x128xbf16, #tpu.memory_space<vmem>>, vector<1x128x128xbf16>
    %96 = vector.shape_cast %95 : vector<1x128x128xbf16> to vector<128x128xbf16>
    %cst_66 = arith.constant dense<0.000000e+00> : vector<128x128xf32>
    %97 = tpu.matmul %0, %94, %cst_66 {dimension_numbers = #tpu.dot_dimension_numbers<[1], [0], [0], [1], [0, 0, 1, 1], [], []>} : vector<128x128xbf16>, vector<128x128xbf16>, vector<128x128xf32> -> vector<128x128xf32>
    %98 = arith.truncf %97 : vector<128x128xf32> to vector<128x128xbf16>
    %cst_67 = arith.constant dense<0.000000e+00> : vector<128x128xf32>
    %99 = tpu.matmul %98, %96, %cst_67 {dimension_numbers = #tpu.dot_dimension_numbers<[1], [0], [0], [1], [0, 0, 1, 1], [], []>} : vector<128x128xbf16>, vector<128x128xbf16>, vector<128x128xf32> -> vector<128x128xf32>
    %c8_68 = arith.constant 8 : index
    %c0_69 = arith.constant 0 : index
    %c0_70 = arith.constant 0 : index
    %100 = vector.load %arg3[%c8_68, %c0_69, %c0_70] : memref<15x1x128xf32, #tpu.memory_space<vmem>>, vector<1x1x128xf32>
    %101 = vector.shape_cast %100 : vector<1x1x128xf32> to vector<1x128xf32>
    %102 = vector.broadcast %101 : vector<1x128xf32> to vector<128x128xf32>
    %103 = arith.addf %99, %102 : vector<128x128xf32>
    %cst_71 = arith.constant 0.000000e+00 : f32
    %104 = vector.broadcast %cst_71 : f32 to vector<128x128xf32>
    %105 = arith.maximumf %103, %104 : vector<128x128xf32>
    %106 = arith.addf %93, %105 : vector<128x128xf32>
    %107 = arith.truncf %106 : vector<128x128xf32> to vector<128x128xbf16>
    %c9 = arith.constant 9 : index
    %c0_72 = arith.constant 0 : index
    %c0_73 = arith.constant 0 : index
    %108 = vector.load %arg2[%c9, %c0_72, %c0_73] : memref<15x128x128xbf16, #tpu.memory_space<vmem>>, vector<1x128x128xbf16>
    %109 = vector.shape_cast %108 : vector<1x128x128xbf16> to vector<128x128xbf16>
    %cst_74 = arith.constant dense<0.000000e+00> : vector<128x128xf32>
    %110 = tpu.matmul %107, %109, %cst_74 {dimension_numbers = #tpu.dot_dimension_numbers<[1], [0], [0], [1], [0, 0, 1, 1], [], []>} : vector<128x128xbf16>, vector<128x128xbf16>, vector<128x128xf32> -> vector<128x128xf32>
    %c9_75 = arith.constant 9 : index
    %c0_76 = arith.constant 0 : index
    %c0_77 = arith.constant 0 : index
    %111 = vector.load %arg3[%c9_75, %c0_76, %c0_77] : memref<15x1x128xf32, #tpu.memory_space<vmem>>, vector<1x1x128xf32>
    %112 = vector.shape_cast %111 : vector<1x1x128xf32> to vector<1x128xf32>
    %113 = vector.broadcast %112 : vector<1x128xf32> to vector<128x128xf32>
    %114 = arith.addf %110, %113 : vector<128x128xf32>
    %cst_78 = arith.constant 0.000000e+00 : f32
    %115 = vector.broadcast %cst_78 : f32 to vector<128x128xf32>
    %116 = arith.maximumf %114, %115 : vector<128x128xf32>
    %117 = arith.truncf %116 : vector<128x128xf32> to vector<128x128xbf16>
    %c10 = arith.constant 10 : index
    %c0_79 = arith.constant 0 : index
    %c0_80 = arith.constant 0 : index
    %118 = vector.load %arg2[%c10, %c0_79, %c0_80] : memref<15x128x128xbf16, #tpu.memory_space<vmem>>, vector<1x128x128xbf16>
    %119 = vector.shape_cast %118 : vector<1x128x128xbf16> to vector<128x128xbf16>
    %cst_81 = arith.constant dense<0.000000e+00> : vector<128x128xf32>
    %120 = tpu.matmul %0, %117, %cst_81 {dimension_numbers = #tpu.dot_dimension_numbers<[1], [0], [0], [1], [0, 0, 1, 1], [], []>} : vector<128x128xbf16>, vector<128x128xbf16>, vector<128x128xf32> -> vector<128x128xf32>
    %121 = arith.truncf %120 : vector<128x128xf32> to vector<128x128xbf16>
    %cst_82 = arith.constant dense<0.000000e+00> : vector<128x128xf32>
    %122 = tpu.matmul %121, %119, %cst_82 {dimension_numbers = #tpu.dot_dimension_numbers<[1], [0], [0], [1], [0, 0, 1, 1], [], []>} : vector<128x128xbf16>, vector<128x128xbf16>, vector<128x128xf32> -> vector<128x128xf32>
    %c10_83 = arith.constant 10 : index
    %c0_84 = arith.constant 0 : index
    %c0_85 = arith.constant 0 : index
    %123 = vector.load %arg3[%c10_83, %c0_84, %c0_85] : memref<15x1x128xf32, #tpu.memory_space<vmem>>, vector<1x1x128xf32>
    %124 = vector.shape_cast %123 : vector<1x1x128xf32> to vector<1x128xf32>
    %125 = vector.broadcast %124 : vector<1x128xf32> to vector<128x128xf32>
    %126 = arith.addf %122, %125 : vector<128x128xf32>
    %cst_86 = arith.constant 0.000000e+00 : f32
    %127 = vector.broadcast %cst_86 : f32 to vector<128x128xf32>
    %128 = arith.maximumf %126, %127 : vector<128x128xf32>
    %129 = arith.truncf %128 : vector<128x128xf32> to vector<128x128xbf16>
    %c11 = arith.constant 11 : index
    %c0_87 = arith.constant 0 : index
    %c0_88 = arith.constant 0 : index
    %130 = vector.load %arg2[%c11, %c0_87, %c0_88] : memref<15x128x128xbf16, #tpu.memory_space<vmem>>, vector<1x128x128xbf16>
    %131 = vector.shape_cast %130 : vector<1x128x128xbf16> to vector<128x128xbf16>
    %cst_89 = arith.constant dense<0.000000e+00> : vector<128x128xf32>
    %132 = tpu.matmul %0, %129, %cst_89 {dimension_numbers = #tpu.dot_dimension_numbers<[1], [0], [0], [1], [0, 0, 1, 1], [], []>} : vector<128x128xbf16>, vector<128x128xbf16>, vector<128x128xf32> -> vector<128x128xf32>
    %133 = arith.truncf %132 : vector<128x128xf32> to vector<128x128xbf16>
    %cst_90 = arith.constant dense<0.000000e+00> : vector<128x128xf32>
    %134 = tpu.matmul %133, %131, %cst_90 {dimension_numbers = #tpu.dot_dimension_numbers<[1], [0], [0], [1], [0, 0, 1, 1], [], []>} : vector<128x128xbf16>, vector<128x128xbf16>, vector<128x128xf32> -> vector<128x128xf32>
    %c11_91 = arith.constant 11 : index
    %c0_92 = arith.constant 0 : index
    %c0_93 = arith.constant 0 : index
    %135 = vector.load %arg3[%c11_91, %c0_92, %c0_93] : memref<15x1x128xf32, #tpu.memory_space<vmem>>, vector<1x1x128xf32>
    %136 = vector.shape_cast %135 : vector<1x1x128xf32> to vector<1x128xf32>
    %137 = vector.broadcast %136 : vector<1x128xf32> to vector<128x128xf32>
    %138 = arith.addf %134, %137 : vector<128x128xf32>
    %cst_94 = arith.constant 0.000000e+00 : f32
    %139 = vector.broadcast %cst_94 : f32 to vector<128x128xf32>
    %140 = arith.maximumf %138, %139 : vector<128x128xf32>
    %141 = arith.addf %128, %140 : vector<128x128xf32>
    %142 = arith.truncf %141 : vector<128x128xf32> to vector<128x128xbf16>
    %c12 = arith.constant 12 : index
    %c0_95 = arith.constant 0 : index
    %c0_96 = arith.constant 0 : index
    %143 = vector.load %arg2[%c12, %c0_95, %c0_96] : memref<15x128x128xbf16, #tpu.memory_space<vmem>>, vector<1x128x128xbf16>
    %144 = vector.shape_cast %143 : vector<1x128x128xbf16> to vector<128x128xbf16>
    %cst_97 = arith.constant dense<0.000000e+00> : vector<128x128xf32>
    %145 = tpu.matmul %142, %144, %cst_97 {dimension_numbers = #tpu.dot_dimension_numbers<[1], [0], [0], [1], [0, 0, 1, 1], [], []>} : vector<128x128xbf16>, vector<128x128xbf16>, vector<128x128xf32> -> vector<128x128xf32>
    %c12_98 = arith.constant 12 : index
    %c0_99 = arith.constant 0 : index
    %c0_100 = arith.constant 0 : index
    %146 = vector.load %arg3[%c12_98, %c0_99, %c0_100] : memref<15x1x128xf32, #tpu.memory_space<vmem>>, vector<1x1x128xf32>
    %147 = vector.shape_cast %146 : vector<1x1x128xf32> to vector<1x128xf32>
    %148 = vector.broadcast %147 : vector<1x128xf32> to vector<128x128xf32>
    %149 = arith.addf %145, %148 : vector<128x128xf32>
    %cst_101 = arith.constant 0.000000e+00 : f32
    %150 = vector.broadcast %cst_101 : f32 to vector<128x128xf32>
    %151 = arith.maximumf %149, %150 : vector<128x128xf32>
    %152 = arith.addf %116, %151 : vector<128x128xf32>
    %153 = arith.truncf %152 : vector<128x128xf32> to vector<128x128xbf16>
    %c13 = arith.constant 13 : index
    %c0_102 = arith.constant 0 : index
    %c0_103 = arith.constant 0 : index
    %154 = vector.load %arg2[%c13, %c0_102, %c0_103] : memref<15x128x128xbf16, #tpu.memory_space<vmem>>, vector<1x128x128xbf16>
    %155 = vector.shape_cast %154 : vector<1x128x128xbf16> to vector<128x128xbf16>
    %cst_104 = arith.constant dense<0.000000e+00> : vector<128x128xf32>
    %156 = tpu.matmul %153, %155, %cst_104 {dimension_numbers = #tpu.dot_dimension_numbers<[1], [0], [0], [1], [0, 0, 1, 1], [], []>} : vector<128x128xbf16>, vector<128x128xbf16>, vector<128x128xf32> -> vector<128x128xf32>
    %c13_105 = arith.constant 13 : index
    %c0_106 = arith.constant 0 : index
    %c0_107 = arith.constant 0 : index
    %157 = vector.load %arg3[%c13_105, %c0_106, %c0_107] : memref<15x1x128xf32, #tpu.memory_space<vmem>>, vector<1x1x128xf32>
    %158 = vector.shape_cast %157 : vector<1x1x128xf32> to vector<1x128xf32>
    %159 = vector.broadcast %158 : vector<1x128xf32> to vector<128x128xf32>
    %160 = arith.addf %156, %159 : vector<128x128xf32>
    %161 = arith.addf %81, %160 : vector<128x128xf32>
    %162 = arith.truncf %161 : vector<128x128xf32> to vector<128x128xbf16>
    %c14 = arith.constant 14 : index
    %c0_108 = arith.constant 0 : index
    %c0_109 = arith.constant 0 : index
    %163 = vector.load %arg2[%c14, %c0_108, %c0_109] : memref<15x128x128xbf16, #tpu.memory_space<vmem>>, vector<1x128x128xbf16>
    %164 = vector.shape_cast %163 : vector<1x128x128xbf16> to vector<128x128xbf16>
    %cst_110 = arith.constant dense<0.000000e+00> : vector<128x128xf32>
    %165 = tpu.matmul %162, %164, %cst_110 {dimension_numbers = #tpu.dot_dimension_numbers<[1], [0], [0], [1], [0, 0, 1, 1], [], []>} : vector<128x128xbf16>, vector<128x128xbf16>, vector<128x128xf32> -> vector<128x128xf32>
    %c14_111 = arith.constant 14 : index
    %c0_112 = arith.constant 0 : index
    %c0_113 = arith.constant 0 : index
    %166 = vector.load %arg3[%c14_111, %c0_112, %c0_113] : memref<15x1x128xf32, #tpu.memory_space<vmem>>, vector<1x1x128xf32>
    %167 = vector.shape_cast %166 : vector<1x1x128xf32> to vector<1x128xf32>
    %168 = vector.broadcast %167 : vector<1x128xf32> to vector<128x128xf32>
    %169 = arith.addf %165, %168 : vector<128x128xf32>
    %c0_114 = arith.constant 0 : index
    %c0_115 = arith.constant 0 : index
    %170 = vector.load %arg4[%c0_114, %c0_115] : memref<128x128xf32, #tpu.memory_space<vmem>>, vector<128x128xf32>
    tpu.vector_store %arg4[%c0_114, %c0_115], %169 {strides = array<i32>} : memref<128x128xf32, #tpu.memory_space<vmem>>, vector<128x128xf32>,
    return
  }
}

</mosaic_0001>

<llo_original>
// kernel: block_hla8_pallas.1
$region0: #{block_hla8_pallas.1}
  #allocation0 [shape = 'u32[]', space=smem, size = 0x4, offset = 0x4, fixed_abs, tag = 'smem constant byte address 0x4 - core index']
  #allocation1 [shape = 'u32[72,128]{1,0:T(1,128)}', space=vmem, size = 0x9000, scoped, tag = 'internal scratch']
  %s0 = inlined_call_operand.vmem [shape: bf16[128,128], index: 0, kind: input, shape index: {}]
  %s1 = inlined_call_operand.vmem [shape: bf16[128,128], index: 1, kind: input, shape index: {}]
  %s2 = inlined_call_operand.vmem [shape: bf16[15,128,128], index: 2, kind: input, shape index: {}]
  %s3 = inlined_call_operand.vmem [shape: f32[15,1,128], index: 3, kind: input, shape index: {}]
  %s4 = inlined_call_operand.vmem [shape: f32[128,128], index: 4, kind: output, shape index: {}]
  %s5 = sld [smem:[#allocation0]]
  $region26: #{block_hla8_pallas.1} parent=0
    _
  %s7 = ssub.s32 1, %s5
  %s8 = scalar_select 0, %s7, %s5
  // Predicated region
  $region2: #{block_hla8_pallas.1} parent=0 // pred_check
    _
  $region3: #{block_hla8_pallas.1} parent=0 // pred_check_branch
    %10 = sbr.rel (0) target = $region5
  $region4: #{block_hla8_pallas.1} parent=0 // pred_region
    _
  $region5: #{block_hla8_pallas.1} parent=0 // pred_fallthru
    _
  // Predicated region
  $region6: #{block_hla8_pallas.1} parent=0 // pred_check
    _
  $region7: #{block_hla8_pallas.1} parent=0 // pred_check_branch
    %12 = sbr.rel (0) target = $region9
  $region8: #{block_hla8_pallas.1} parent=0 // pred_region
    _
  $region9: #{block_hla8_pallas.1} parent=0 // pred_fallthru
    _
  // Predicated region
  $region10: #{block_hla8_pallas.1} parent=0 // pred_check
    _
  $region11: #{block_hla8_pallas.1} parent=0 // pred_check_branch
    %14 = sbr.rel (0) target = $region13
  $region12: #{block_hla8_pallas.1} parent=0 // pred_region
    _
  $region13: #{block_hla8_pallas.1} parent=0 // pred_fallthru
    _
  // Predicated region
  $region14: #{block_hla8_pallas.1} parent=0 // pred_check
    _
  $region15: #{block_hla8_pallas.1} parent=0 // pred_check_branch
    %16 = sbr.rel (0) target = $region17
  $region16: #{block_hla8_pallas.1} parent=0 // pred_region
    _
  $region17: #{block_hla8_pallas.1} parent=0 // pred_fallthru
    _
  %v17 = vld [vmem:[%s0] sm:$0xf]
  %v18 = vld [vmem:[%s0 + $0x4] sm:$0xf]
  %v19 = vld [vmem:[%s0 + $0x8] sm:$0xf]
  %v20 = vld [vmem:[%s0 + $0xc] sm:$0xf]
  %v21 = vld [vmem:[%s0 + $0x10] sm:$0xf]
  %v22 = vld [vmem:[%s0 + $0x14] sm:$0xf]
  %v23 = vld [vmem:[%s0 + $0x18] sm:$0xf]
  %v24 = vld [vmem:[%s0 + $0x1c] sm:$0xf]
  %v25 = vld [vmem:[%s0 + $0x20] sm:$0xf]
  %v26 = vld [vmem:[%s0 + $0x24] sm:$0xf]
  %v27 = vld [vmem:[%s0 + $0x28] sm:$0xf]
  %v28 = vld [vmem:[%s0 + $0x2c] sm:$0xf]
  %v29 = vld [vmem:[%s0 + $0x30] sm:$0xf]
  %v30 = vld [vmem:[%s0 + $0x34] sm:$0xf]
  %v31 = vld [vmem:[%s0 + $0x38] sm:$0xf]
  %v32 = vld [vmem:[%s0 + $0x3c] sm:$0xf]
  %v33 = vld [vmem:[%s1] sm:$0xf]
  %v34 = vld [vmem:[%s1 + $0x4] sm:$0xf]
  %v35 = vld [vmem:[%s1 + $0x8] sm:$0xf]
  %v36 = vld [vmem:[%s1 + $0xc] sm:$0xf]
  %v37 = vld [vmem:[%s1 + $0x10] sm:$0xf]
  %v38 = vld [vmem:[%s1 + $0x14] sm:$0xf]
  %v39 = vld [vmem:[%s1 + $0x18] sm:$0xf]
  %v40 = vld [vmem:[%s1 + $0x1c] sm:$0xf]
  %v41 = vld [vmem:[%s1 + $0x20] sm:$0xf]
  %v42 = vld [vmem:[%s1 + $0x24] sm:$0xf]
  %v43 = vld [vmem:[%s1 + $0x28] sm:$0xf]
  %v44 = vld [vmem:[%s1 + $0x2c] sm:$0xf]
  %v45 = vld [vmem:[%s1 + $0x30] sm:$0xf]
  %v46 = vld [vmem:[%s1 + $0x34] sm:$0xf]
  %v47 = vld [vmem:[%s1 + $0x38] sm:$0xf]
  %v48 = vld [vmem:[%s1 + $0x3c] sm:$0xf]
  %v49 = vld [vmem:[%s2] sm:$0xf]
  %v50 = vld [vmem:[%s2 + $0x4] sm:$0xf]
  %v51 = vld [vmem:[%s2 + $0x8] sm:$0xf]
  %v52 = vld [vmem:[%s2 + $0xc] sm:$0xf]
  %v53 = vld [vmem:[%s2 + $0x10] sm:$0xf]
  %v54 = vld [vmem:[%s2 + $0x14] sm:$0xf]
  %v55 = vld [vmem:[%s2 + $0x18] sm:$0xf]
  %v56 = vld [vmem:[%s2 + $0x1c] sm:$0xf]
  %v57 = vld [vmem:[%s2 + $0x20] sm:$0xf]
  %v58 = vld [vmem:[%s2 + $0x24] sm:$0xf]
  %v59 = vld [vmem:[%s2 + $0x28] sm:$0xf]
  %v60 = vld [vmem:[%s2 + $0x2c] sm:$0xf]
  %v61 = vld [vmem:[%s2 + $0x30] sm:$0xf]
  %v62 = vld [vmem:[%s2 + $0x34] sm:$0xf]
  %v63 = vld [vmem:[%s2 + $0x38] sm:$0xf]
  %v64 = vld [vmem:[%s2 + $0x3c] sm:$0xf]
  %v81 = vunpack.c.l.b16 %v17
  %v82 = vunpack.c.l.b16 %v18
  %v83 = vunpack.c.l.b16 %v19
  %v84 = vunpack.c.l.b16 %v20
  %v85 = vunpack.c.l.b16 %v21
  %v86 = vunpack.c.l.b16 %v22
  %v87 = vunpack.c.l.b16 %v23
  %v88 = vunpack.c.l.b16 %v24
  %v89 = vunpack.c.l.b16 %v25
  %v90 = vunpack.c.l.b16 %v26
  %v91 = vunpack.c.l.b16 %v27
  %v92 = vunpack.c.l.b16 %v28
  %v93 = vunpack.c.l.b16 %v29
  %v94 = vunpack.c.l.b16 %v30
  %v95 = vunpack.c.l.b16 %v31
  %v96 = vunpack.c.l.b16 %v32
  %v97 = vpack.c.b16 %v82, %v81
  %v98 = vpack.c.b16 %v84, %v83
  %v99 = vpack.c.b16 %v86, %v85
  %v100 = vpack.c.b16 %v88, %v87
  %v101 = vpack.c.b16 %v90, %v89
  %v102 = vpack.c.b16 %v92, %v91
  %v103 = vpack.c.b16 %v94, %v93
  %v104 = vpack.c.b16 %v96, %v95
  %v129 = vunpack.c.l.b16 %v33
  %v130 = vunpack.c.l.b16 %v34
  %v131 = vunpack.c.l.b16 %v35
  %v132 = vunpack.c.l.b16 %v36
  %v133 = vunpack.c.l.b16 %v37
  %v134 = vunpack.c.l.b16 %v38
  %v135 = vunpack.c.l.b16 %v39
  %v136 = vunpack.c.l.b16 %v40
  %v137 = vunpack.c.l.b16 %v41
  %v138 = vunpack.c.l.b16 %v42
  %v139 = vunpack.c.l.b16 %v43
  %v140 = vunpack.c.l.b16 %v44
  %v141 = vunpack.c.l.b16 %v45
  %v142 = vunpack.c.l.b16 %v46
  %v143 = vunpack.c.l.b16 %v47
  %v144 = vunpack.c.l.b16 %v48
  %v145 = vpack.c.b16 %v130, %v129
  %v146 = vpack.c.b16 %v132, %v131
  %v147 = vpack.c.b16 %v134, %v133
  %v148 = vpack.c.b16 %v136, %v135
  %v149 = vpack.c.b16 %v138, %v137
  %v150 = vpack.c.b16 %v140, %v139
  %v151 = vpack.c.b16 %v142, %v141
  %v152 = vpack.c.b16 %v144, %v143
  %161 = vmatpush.bf16.msra.mxu0 %v152
  %162 = vmatpush.bf16.msra.mxu0 %v151
  %163 = vmatpush.bf16.msra.mxu0 %v150
  %164 = vmatpush.bf16.msra.mxu0 %v149
  %165 = vmatpush.bf16.msra.mxu0 %v148
  %166 = vmatpush.bf16.msra.mxu0 %v147
  %167 = vmatpush.bf16.msra.mxu0 %v146
  %168 = vmatpush.bf16.msra.mxu0 %v145
  %169 = vmatmul.bf16.gmra.mxu0 %v97
  %v170 = vpop.f32.mrf.mxu0
  %v171 = vadd.f32 0.0, %v170
  %v172 = vpop.f32.mrf.mxu0
  %v173 = vadd.f32 0.0, %v172
  %174 = vmatmul.bf16.gmra.mxu0 %v98
  %v175 = vpop.f32.mrf.mxu0
  %v176 = vadd.f32 0.0, %v175
  %v177 = vpop.f32.mrf.mxu0
  %v178 = vadd.f32 0.0, %v177
  %179 = vmatmul.bf16.gmra.mxu0 %v99
  %v180 = vpop.f32.mrf.mxu0
  %v181 = vadd.f32 0.0, %v180
  %v182 = vpop.f32.mrf.mxu0
  %v183 = vadd.f32 0.0, %v182
  %184 = vmatmul.bf16.gmra.mxu0 %v100
  %v185 = vpop.f32.mrf.mxu0
  %v186 = vadd.f32 0.0, %v185
  %v187 = vpop.f32.mrf.mxu0
  %v188 = vadd.f32 0.0, %v187
  %189 = vmatmul.bf16.gmra.mxu0 %v101
  %v190 = vpop.f32.mrf.mxu0
  %v191 = vadd.f32 0.0, %v190
  %v192 = vpop.f32.mrf.mxu0
  %v193 = vadd.f32 0.0, %v192
  %194 = vmatmul.bf16.gmra.mxu0 %v102
  %v195 = vpop.f32.mrf.mxu0
  %v196 = vadd.f32 0.0, %v195
  %v197 = vpop.f32.mrf.mxu0
  %v198 = vadd.f32 0.0, %v197
  %199 = vmatmul.bf16.gmra.mxu0 %v103
  %v200 = vpop.f32.mrf.mxu0
  %v201 = vadd.f32 0.0, %v200
  %v202 = vpop.f32.mrf.mxu0
  %v203 = vadd.f32 0.0, %v202
  %204 = vmatmul.bf16.gmra.mxu0 %v104
  %v205 = vpop.f32.mrf.mxu0
  %v206 = vadd.f32 0.0, %v205
  %v207 = vpop.f32.mrf.mxu0
  %v208 = vadd.f32 0.0, %v207
  %209 = vdwg.mxu0
  %v210 = vpack.c.bf16 %v173, %v171
  %v211 = vpack.c.bf16 %v178, %v176
  %v212 = vpack.c.bf16 %v183, %v181
  %v213 = vpack.c.bf16 %v188, %v186
  %v214 = vpack.c.bf16 %v193, %v191
  %v215 = vpack.c.bf16 %v198, %v196
  %v216 = vpack.c.bf16 %v203, %v201
  %v217 = vpack.c.bf16 %v208, %v206
  %v218 = vld [vmem:[%s3] sm:$0x1]
  %v220 = vperm.slane %v218, 0
  %v238 = vunpack.c.l.b16 %v49
  %v239 = vunpack.c.l.b16 %v50
  %v240 = vunpack.c.l.b16 %v51
  %v241 = vunpack.c.l.b16 %v52
  %v242 = vunpack.c.l.b16 %v53
  %v243 = vunpack.c.l.b16 %v54
  %v244 = vunpack.c.l.b16 %v55
  %v245 = vunpack.c.l.b16 %v56
  %v246 = vunpack.c.l.b16 %v57
  %v247 = vunpack.c.l.b16 %v58
  %v248 = vunpack.c.l.b16 %v59
  %v249 = vunpack.c.l.b16 %v60
  %v250 = vunpack.c.l.b16 %v61
  %v251 = vunpack.c.l.b16 %v62
  %v252 = vunpack.c.l.b16 %v63
  %v253 = vunpack.c.l.b16 %v64
  %v254 = vpack.c.b16 %v239, %v238
  %v255 = vpack.c.b16 %v241, %v240
  %v256 = vpack.c.b16 %v243, %v242
  %v257 = vpack.c.b16 %v245, %v244
  %v258 = vpack.c.b16 %v247, %v246
  %v259 = vpack.c.b16 %v249, %v248
  %v260 = vpack.c.b16 %v251, %v250
  %v261 = vpack.c.b16 %v253, %v252
  %270 = vmatpush.bf16.msra.mxu0 %v261
  %271 = vmatpush.bf16.msra.mxu0 %v260
  %272 = vmatpush.bf16.msra.mxu0 %v259
  %273 = vmatpush.bf16.msra.mxu0 %v258
  %274 = vmatpush.bf16.msra.mxu0 %v257
  %275 = vmatpush.bf16.msra.mxu0 %v256
  %276 = vmatpush.bf16.msra.mxu0 %v255
  %277 = vmatpush.bf16.msra.mxu0 %v254
  %278 = vmatmul.bf16.gmra.mxu0 %v210
  %v279 = vpop.f32.mrf.mxu0
  %v280 = vadd.f32 %v220, %v279
  %v281 = vpop.f32.mrf.mxu0
  %v282 = vadd.f32 %v220, %v281
  %283 = vmatmul.bf16.gmra.mxu0 %v211
  %v284 = vpop.f32.mrf.mxu0
  %v285 = vadd.f32 %v220, %v284
  %v286 = vpop.f32.mrf.mxu0
  %v287 = vadd.f32 %v220, %v286
  %288 = vmatmul.bf16.gmra.mxu0 %v212
  %v289 = vpop.f32.mrf.mxu0
  %v290 = vadd.f32 %v220, %v289
  %v291 = vpop.f32.mrf.mxu0
  %v292 = vadd.f32 %v220, %v291
  %293 = vmatmul.bf16.gmra.mxu0 %v213
  %v294 = vpop.f32.mrf.mxu0
  %v295 = vadd.f32 %v220, %v294
  %v296 = vpop.f32.mrf.mxu0
  %v297 = vadd.f32 %v220, %v296
  %298 = vmatmul.bf16.gmra.mxu0 %v214
  %v299 = vpop.f32.mrf.mxu0
  %v300 = vadd.f32 %v220, %v299
  %v301 = vpop.f32.mrf.mxu0
  %v302 = vadd.f32 %v220, %v301
  %303 = vmatmul.bf16.gmra.mxu0 %v215
  %v304 = vpop.f32.mrf.mxu0
  %v305 = vadd.f32 %v220, %v304
  %v306 = vpop.f32.mrf.mxu0
  %v307 = vadd.f32 %v220, %v306
  %308 = vmatmul.bf16.gmra.mxu0 %v216
  %v309 = vpop.f32.mrf.mxu0
  %v310 = vadd.f32 %v220, %v309
  %v311 = vpop.f32.mrf.mxu0
  %v312 = vadd.f32 %v220, %v311
  %313 = vmatmul.bf16.gmra.mxu0 %v217
  %v314 = vpop.f32.mrf.mxu0
  %v315 = vadd.f32 %v220, %v314
  %v316 = vpop.f32.mrf.mxu0
  %v317 = vadd.f32 %v220, %v316
  %318 = vdwg.mxu0
  %v319 = vmax.f32 %v280, 0.0
  %v320 = vmax.f32 %v282, 0.0
  %v321 = vmax.f32 %v285, 0.0
  %v322 = vmax.f32 %v287, 0.0
  %v323 = vmax.f32 %v290, 0.0
  %v324 = vmax.f32 %v292, 0.0
  %v325 = vmax.f32 %v295, 0.0
  %v326 = vmax.f32 %v297, 0.0
  %v327 = vmax.f32 %v300, 0.0
  %v328 = vmax.f32 %v302, 0.0
  %v329 = vmax.f32 %v305, 0.0
  %v330 = vmax.f32 %v307, 0.0
  %v331 = vmax.f32 %v310, 0.0
  %v332 = vmax.f32 %v312, 0.0
  %v333 = vmax.f32 %v315, 0.0
  %v334 = vmax.f32 %v317, 0.0
  %v335 = vpack.c.bf16 %v320, %v319
  %v336 = vpack.c.bf16 %v322, %v321
  %v337 = vpack.c.bf16 %v324, %v323
  %v338 = vpack.c.bf16 %v326, %v325
  %v339 = vpack.c.bf16 %v328, %v327
  %v340 = vpack.c.bf16 %v330, %v329
  %v341 = vpack.c.bf16 %v332, %v331
  %v342 = vpack.c.bf16 %v334, %v333
  %s343 = scalar_lea.vmem %s2, 64
  %v344 = vld [vmem:[%s343] sm:$0xf]
  %v345 = vld [vmem:[%s343 + $0x4] sm:$0xf]
  %v346 = vld [vmem:[%s343 + $0x8] sm:$0xf]
  %v347 = vld [vmem:[%s343 + $0xc] sm:$0xf]
  %v348 = vld [vmem:[%s343 + $0x10] sm:$0xf]
  %v349 = vld [vmem:[%s343 + $0x14] sm:$0xf]
  %v350 = vld [vmem:[%s343 + $0x18] sm:$0xf]
  %v351 = vld [vmem:[%s343 + $0x1c] sm:$0xf]
  %v352 = vld [vmem:[%s343 + $0x20] sm:$0xf]
  %v353 = vld [vmem:[%s343 + $0x24] sm:$0xf]
  %v354 = vld [vmem:[%s343 + $0x28] sm:$0xf]
  %v355 = vld [vmem:[%s343 + $0x2c] sm:$0xf]
  %v356 = vld [vmem:[%s343 + $0x30] sm:$0xf]
  %v357 = vld [vmem:[%s343 + $0x34] sm:$0xf]
  %v358 = vld [vmem:[%s343 + $0x38] sm:$0xf]
  %v359 = vld [vmem:[%s343 + $0x3c] sm:$0xf]
  %360 = vmatpush.bf16.msra.mxu0 %v342
  %361 = vmatpush.bf16.msra.mxu0 %v341
  %362 = vmatpush.bf16.msra.mxu0 %v340
  %363 = vmatpush.bf16.msra.mxu0 %v339
  %364 = vmatpush.bf16.msra.mxu0 %v338
  %365 = vmatpush.bf16.msra.mxu0 %v337
  %366 = vmatpush.bf16.msra.mxu0 %v336
  %367 = vmatpush.bf16.msra.mxu0 %v335
  %368 = vmatmul.bf16.gmra.mxu0 %v97
  %v369 = vpop.f32.mrf.mxu0
  %v370 = vadd.f32 0.0, %v369
  %v371 = vpop.f32.mrf.mxu0
  %v372 = vadd.f32 0.0, %v371
  %373 = vmatmul.bf16.gmra.mxu0 %v98
  %v374 = vpop.f32.mrf.mxu0
  %v375 = vadd.f32 0.0, %v374
  %v376 = vpop.f32.mrf.mxu0
  %v377 = vadd.f32 0.0, %v376
  %378 = vmatmul.bf16.gmra.mxu0 %v99
  %v379 = vpop.f32.mrf.mxu0
  %v380 = vadd.f32 0.0, %v379
  %v381 = vpop.f32.mrf.mxu0
  %v382 = vadd.f32 0.0, %v381
  %383 = vmatmul.bf16.gmra.mxu0 %v100
  %v384 = vpop.f32.mrf.mxu0
  %v385 = vadd.f32 0.0, %v384
  %v386 = vpop.f32.mrf.mxu0
  %v387 = vadd.f32 0.0, %v386
  %388 = vmatmul.bf16.gmra.mxu0 %v101
  %v389 = vpop.f32.mrf.mxu0
  %v390 = vadd.f32 0.0, %v389
  %v391 = vpop.f32.mrf.mxu0
  %v392 = vadd.f32 0.0, %v391
  %393 = vmatmul.bf16.gmra.mxu0 %v102
  %v394 = vpop.f32.mrf.mxu0
  %v395 = vadd.f32 0.0, %v394
  %v396 = vpop.f32.mrf.mxu0
  %v397 = vadd.f32 0.0, %v396
  %398 = vmatmul.bf16.gmra.mxu0 %v103
  %v399 = vpop.f32.mrf.mxu0
  %v400 = vadd.f32 0.0, %v399
  %v401 = vpop.f32.mrf.mxu0
  %v402 = vadd.f32 0.0, %v401
  %403 = vmatmul.bf16.gmra.mxu0 %v104
  %v404 = vpop.f32.mrf.mxu0
  %v405 = vadd.f32 0.0, %v404
  %v406 = vpop.f32.mrf.mxu0
  %v407 = vadd.f32 0.0, %v406
  %408 = vdwg.mxu0
  %v409 = vpack.c.bf16 %v372, %v370
  %v410 = vpack.c.bf16 %v377, %v375
  %v411 = vpack.c.bf16 %v382, %v380
  %v412 = vpack.c.bf16 %v387, %v385
  %v413 = vpack.c.bf16 %v392, %v390
  %v414 = vpack.c.bf16 %v397, %v395
  %v415 = vpack.c.bf16 %v402, %v400
  %v416 = vpack.c.bf16 %v407, %v405
  %s417 = scalar_lea.vmem %s3, 1
  %v418 = vld [vmem:[%s417] sm:$0x1]
  %v420 = vperm.slane %v418, 0
  %v438 = vunpack.c.l.b16 %v344
  %v439 = vunpack.c.l.b16 %v345
  %v440 = vunpack.c.l.b16 %v346
  %v441 = vunpack.c.l.b16 %v347
  %v442 = vunpack.c.l.b16 %v348
  %v443 = vunpack.c.l.b16 %v349
  %v444 = vunpack.c.l.b16 %v350
  %v445 = vunpack.c.l.b16 %v351
  %v446 = vunpack.c.l.b16 %v352
  %v447 = vunpack.c.l.b16 %v353
  %v448 = vunpack.c.l.b16 %v354
  %v449 = vunpack.c.l.b16 %v355
  %v450 = vunpack.c.l.b16 %v356
  %v451 = vunpack.c.l.b16 %v357
  %v452 = vunpack.c.l.b16 %v358
  %v453 = vunpack.c.l.b16 %v359
  %v454 = vpack.c.b16 %v439, %v438
  %v455 = vpack.c.b16 %v441, %v440
  %v456 = vpack.c.b16 %v443, %v442
  %v457 = vpack.c.b16 %v445, %v444
  %v458 = vpack.c.b16 %v447, %v446
  %v459 = vpack.c.b16 %v449, %v448
  %v460 = vpack.c.b16 %v451, %v450
  %v461 = vpack.c.b16 %v453, %v452
  %470 = vmatpush.bf16.msra.mxu0 %v461
  %471 = vmatpush.bf16.msra.mxu0 %v460
  %472 = vmatpush.bf16.msra.mxu0 %v459
  %473 = vmatpush.bf16.msra.mxu0 %v458
  %474 = vmatpush.bf16.msra.mxu0 %v457
  %475 = vmatpush.bf16.msra.mxu0 %v456
  %476 = vmatpush.bf16.msra.mxu0 %v455
  %477 = vmatpush.bf16.msra.mxu0 %v454
  %478 = vmatmul.bf16.gmra.mxu0 %v409
  %v479 = vpop.f32.mrf.mxu0
  %v480 = vadd.f32 %v420, %v479
  %v481 = vpop.f32.mrf.mxu0
  %v482 = vadd.f32 %v420, %v481
  %483 = vmatmul.bf16.gmra.mxu0 %v410
  %v484 = vpop.f32.mrf.mxu0
  %v485 = vadd.f32 %v420, %v484
  %v486 = vpop.f32.mrf.mxu0
  %v487 = vadd.f32 %v420, %v486
  %488 = vmatmul.bf16.gmra.mxu0 %v411
  %v489 = vpop.f32.mrf.mxu0
  %v490 = vadd.f32 %v420, %v489
  %v491 = vpop.f32.mrf.mxu0
  %v492 = vadd.f32 %v420, %v491
  %493 = vmatmul.bf16.gmra.mxu0 %v412
  %v494 = vpop.f32.mrf.mxu0
  %v495 = vadd.f32 %v420, %v494
  %v496 = vpop.f32.mrf.mxu0
  %v497 = vadd.f32 %v420, %v496
  %498 = vmatmul.bf16.gmra.mxu0 %v413
  %v499 = vpop.f32.mrf.mxu0
  %v500 = vadd.f32 %v420, %v499
  %v501 = vpop.f32.mrf.mxu0
  %v502 = vadd.f32 %v420, %v501
  %503 = vmatmul.bf16.gmra.mxu0 %v414
  %v504 = vpop.f32.mrf.mxu0
  %v505 = vadd.f32 %v420, %v504
  %v506 = vpop.f32.mrf.mxu0
  %v507 = vadd.f32 %v420, %v506
  %508 = vmatmul.bf16.gmra.mxu0 %v415
  %v509 = vpop.f32.mrf.mxu0
  %v510 = vadd.f32 %v420, %v509
  %v511 = vpop.f32.mrf.mxu0
  %v512 = vadd.f32 %v420, %v511
  %513 = vmatmul.bf16.gmra.mxu0 %v416
  %v514 = vpop.f32.mrf.mxu0
  %v515 = vadd.f32 %v420, %v514
  %v516 = vpop.f32.mrf.mxu0
  %v517 = vadd.f32 %v420, %v516
  %518 = vdwg.mxu0
  %v519 = vmax.f32 %v480, 0.0
  %v520 = vmax.f32 %v482, 0.0
  %v521 = vmax.f32 %v485, 0.0
  %v522 = vmax.f32 %v487, 0.0
  %v523 = vmax.f32 %v490, 0.0
  %v524 = vmax.f32 %v492, 0.0
  %v525 = vmax.f32 %v495, 0.0
  %v526 = vmax.f32 %v497, 0.0
  %v527 = vmax.f32 %v500, 0.0
  %v528 = vmax.f32 %v502, 0.0
  %v529 = vmax.f32 %v505, 0.0
  %v530 = vmax.f32 %v507, 0.0
  %v531 = vmax.f32 %v510, 0.0
  %v532 = vmax.f32 %v512, 0.0
  %v533 = vmax.f32 %v515, 0.0
  %v534 = vmax.f32 %v517, 0.0
  %v535 = vadd.f32 %v319, %v519
  %v536 = vadd.f32 %v320, %v520
  %v537 = vadd.f32 %v321, %v521
  %v538 = vadd.f32 %v322, %v522
  %v539 = vadd.f32 %v323, %v523
  %v540 = vadd.f32 %v324, %v524
  %v541 = vadd.f32 %v325, %v525
  %v542 = vadd.f32 %v326, %v526
  %v543 = vadd.f32 %v327, %v527
  %v544 = vadd.f32 %v328, %v528
  %v545 = vadd.f32 %v329, %v529
  %v546 = vadd.f32 %v330, %v530
  %v547 = vadd.f32 %v331, %v531
  %v548 = vadd.f32 %v332, %v532
  %v549 = vadd.f32 %v333, %v533
  %v550 = vadd.f32 %v334, %v534
  %v551 = vpack.c.bf16 %v536, %v535
  %v552 = vpack.c.bf16 %v538, %v537
  %v553 = vpack.c.bf16 %v540, %v539
  %v554 = vpack.c.bf16 %v542, %v541
  %v555 = vpack.c.bf16 %v544, %v543
  %v556 = vpack.c.bf16 %v546, %v545
  %v557 = vpack.c.bf16 %v548, %v547
  %v558 = vpack.c.bf16 %v550, %v549
  %s559 = scalar_lea.vmem %s2, 128
  %v560 = vld [vmem:[%s559] sm:$0xf]
  %v561 = vld [vmem:[%s559 + $0x4] sm:$0xf]
  %v562 = vld [vmem:[%s559 + $0x8] sm:$0xf]
  %v563 = vld [vmem:[%s559 + $0xc] sm:$0xf]
  %v564 = vld [vmem:[%s559 + $0x10] sm:$0xf]
  %v565 = vld [vmem:[%s559 + $0x14] sm:$0xf]
  %v566 = vld [vmem:[%s559 + $0x18] sm:$0xf]
  %v567 = vld [vmem:[%s559 + $0x1c] sm:$0xf]
  %v568 = vld [vmem:[%s559 + $0x20] sm:$0xf]
  %v569 = vld [vmem:[%s559 + $0x24] sm:$0xf]
  %v570 = vld [vmem:[%s559 + $0x28] sm:$0xf]
  %v571 = vld [vmem:[%s559 + $0x2c] sm:$0xf]
  %v572 = vld [vmem:[%s559 + $0x30] sm:$0xf]
  %v573 = vld [vmem:[%s559 + $0x34] sm:$0xf]
  %v574 = vld [vmem:[%s559 + $0x38] sm:$0xf]
  %v575 = vld [vmem:[%s559 + $0x3c] sm:$0xf]
  %s576 = scalar_lea.vmem %s3, 2
  %v577 = vld [vmem:[%s576] sm:$0x1]
  %v579 = vperm.slane %v577, 0
  %v597 = vunpack.c.l.b16 %v560
  %v598 = vunpack.c.l.b16 %v561
  %v599 = vunpack.c.l.b16 %v562
  %v600 = vunpack.c.l.b16 %v563
  %v601 = vunpack.c.l.b16 %v564
  %v602 = vunpack.c.l.b16 %v565
  %v603 = vunpack.c.l.b16 %v566
  %v604 = vunpack.c.l.b16 %v567
  %v605 = vunpack.c.l.b16 %v568
  %v606 = vunpack.c.l.b16 %v569
  %v607 = vunpack.c.l.b16 %v570
  %v608 = vunpack.c.l.b16 %v571
  %v609 = vunpack.c.l.b16 %v572
  %v610 = vunpack.c.l.b16 %v573
  %v611 = vunpack.c.l.b16 %v574
  %v612 = vunpack.c.l.b16 %v575
  %v613 = vpack.c.b16 %v598, %v597
  %v614 = vpack.c.b16 %v600, %v599
  %v615 = vpack.c.b16 %v602, %v601
  %v616 = vpack.c.b16 %v604, %v603
  %v617 = vpack.c.b16 %v606, %v605
  %v618 = vpack.c.b16 %v608, %v607
  %v619 = vpack.c.b16 %v610, %v609
  %v620 = vpack.c.b16 %v612, %v611
  %629 = vmatpush.bf16.msra.mxu0 %v620
  %630 = vmatpush.bf16.msra.mxu0 %v619
  %631 = vmatpush.bf16.msra.mxu0 %v618
  %632 = vmatpush.bf16.msra.mxu0 %v617
  %633 = vmatpush.bf16.msra.mxu0 %v616
  %634 = vmatpush.bf16.msra.mxu0 %v615
  %635 = vmatpush.bf16.msra.mxu0 %v614
  %636 = vmatpush.bf16.msra.mxu0 %v613
  %637 = vmatmul.bf16.gmra.mxu0 %v551
  %v638 = vpop.f32.mrf.mxu0
  %v639 = vadd.f32 %v579, %v638
  %v640 = vpop.f32.mrf.mxu0
  %v641 = vadd.f32 %v579, %v640
  %642 = vmatmul.bf16.gmra.mxu0 %v552
  %v643 = vpop.f32.mrf.mxu0
  %v644 = vadd.f32 %v579, %v643
  %v645 = vpop.f32.mrf.mxu0
  %v646 = vadd.f32 %v579, %v645
  %647 = vmatmul.bf16.gmra.mxu0 %v553
  %v648 = vpop.f32.mrf.mxu0
  %v649 = vadd.f32 %v579, %v648
  %v650 = vpop.f32.mrf.mxu0
  %v651 = vadd.f32 %v579, %v650
  %652 = vmatmul.bf16.gmra.mxu0 %v554
  %v653 = vpop.f32.mrf.mxu0
  %v654 = vadd.f32 %v579, %v653
  %v655 = vpop.f32.mrf.mxu0
  %v656 = vadd.f32 %v579, %v655
  %657 = vmatmul.bf16.gmra.mxu0 %v555
  %v658 = vpop.f32.mrf.mxu0
  %v659 = vadd.f32 %v579, %v658
  %v660 = vpop.f32.mrf.mxu0
  %v661 = vadd.f32 %v579, %v660
  %662 = vmatmul.bf16.gmra.mxu0 %v556
  %v663 = vpop.f32.mrf.mxu0
  %v664 = vadd.f32 %v579, %v663
  %v665 = vpop.f32.mrf.mxu0
  %v666 = vadd.f32 %v579, %v665
  %667 = vmatmul.bf16.gmra.mxu0 %v557
  %v668 = vpop.f32.mrf.mxu0
  %v669 = vadd.f32 %v579, %v668
  %v670 = vpop.f32.mrf.mxu0
  %v671 = vadd.f32 %v579, %v670
  %672 = vmatmul.bf16.gmra.mxu0 %v558
  %v673 = vpop.f32.mrf.mxu0
  %v674 = vadd.f32 %v579, %v673
  %v675 = vpop.f32.mrf.mxu0
  %v676 = vadd.f32 %v579, %v675
  %677 = vdwg.mxu0
  %v678 = vmax.f32 %v639, 0.0
  %v679 = vmax.f32 %v641, 0.0
  %v680 = vmax.f32 %v644, 0.0
  %v681 = vmax.f32 %v646, 0.0
  %v682 = vmax.f32 %v649, 0.0
  %v683 = vmax.f32 %v651, 0.0
  %v684 = vmax.f32 %v654, 0.0
  %v685 = vmax.f32 %v656, 0.0
  %v686 = vmax.f32 %v659, 0.0
  %v687 = vmax.f32 %v661, 0.0
  %v688 = vmax.f32 %v664, 0.0
  %v689 = vmax.f32 %v666, 0.0
  %v690 = vmax.f32 %v669, 0.0
  %v691 = vmax.f32 %v671, 0.0
  %v692 = vmax.f32 %v674, 0.0
  %v693 = vmax.f32 %v676, 0.0
  %v694 = vpack.c.bf16 %v679, %v678
  %v695 = vpack.c.bf16 %v681, %v680
  %v696 = vpack.c.bf16 %v683, %v682
  %v697 = vpack.c.bf16 %v685, %v684
  %v698 = vpack.c.bf16 %v687, %v686
  %v699 = vpack.c.bf16 %v689, %v688
  %v700 = vpack.c.bf16 %v691, %v690
  %v701 = vpack.c.bf16 %v693, %v692
  %s702 = scalar_lea.vmem %s2, 192
  %v703 = vld [vmem:[%s702] sm:$0xf]
  %v704 = vld [vmem:[%s702 + $0x4] sm:$0xf]
  %v705 = vld [vmem:[%s702 + $0x8] sm:$0xf]
  %v706 = vld [vmem:[%s702 + $0xc] sm:$0xf]
  %v707 = vld [vmem:[%s702 + $0x10] sm:$0xf]
  %v708 = vld [vmem:[%s702 + $0x14] sm:$0xf]
  %v709 = vld [vmem:[%s702 + $0x18] sm:$0xf]
  %v710 = vld [vmem:[%s702 + $0x1c] sm:$0xf]
  %v711 = vld [vmem:[%s702 + $0x20] sm:$0xf]
  %v712 = vld [vmem:[%s702 + $0x24] sm:$0xf]
  %v713 = vld [vmem:[%s702 + $0x28] sm:$0xf]
  %v714 = vld [vmem:[%s702 + $0x2c] sm:$0xf]
  %v715 = vld [vmem:[%s702 + $0x30] sm:$0xf]
  %v716 = vld [vmem:[%s702 + $0x34] sm:$0xf]
  %v717 = vld [vmem:[%s702 + $0x38] sm:$0xf]
  %v718 = vld [vmem:[%s702 + $0x3c] sm:$0xf]
  %719 = vmatpush.bf16.msra.mxu0 %v701
  %720 = vmatpush.bf16.msra.mxu0 %v700
  %721 = vmatpush.bf16.msra.mxu0 %v699
  %722 = vmatpush.bf16.msra.mxu0 %v698
  %723 = vmatpush.bf16.msra.mxu0 %v697
  %724 = vmatpush.bf16.msra.mxu0 %v696
  %725 = vmatpush.bf16.msra.mxu0 %v695
  %726 = vmatpush.bf16.msra.mxu0 %v694
  %727 = vmatmul.bf16.gmra.mxu0 %v97
  %v728 = vpop.f32.mrf.mxu0
  %v729 = vadd.f32 0.0, %v728
  %v730 = vpop.f32.mrf.mxu0
  %v731 = vadd.f32 0.0, %v730
  %732 = vmatmul.bf16.gmra.mxu0 %v98
  %v733 = vpop.f32.mrf.mxu0
  %v734 = vadd.f32 0.0, %v733
  %v735 = vpop.f32.mrf.mxu0
  %v736 = vadd.f32 0.0, %v735
  %737 = vmatmul.bf16.gmra.mxu0 %v99
  %v738 = vpop.f32.mrf.mxu0
  %v739 = vadd.f32 0.0, %v738
  %v740 = vpop.f32.mrf.mxu0
  %v741 = vadd.f32 0.0, %v740
  %742 = vmatmul.bf16.gmra.mxu0 %v100
  %v743 = vpop.f32.mrf.mxu0
  %v744 = vadd.f32 0.0, %v743
  %v745 = vpop.f32.mrf.mxu0
  %v746 = vadd.f32 0.0, %v745
  %747 = vmatmul.bf16.gmra.mxu0 %v101
  %v748 = vpop.f32.mrf.mxu0
  %v749 = vadd.f32 0.0, %v748
  %v750 = vpop.f32.mrf.mxu0
  %v751 = vadd.f32 0.0, %v750
  %752 = vmatmul.bf16.gmra.mxu0 %v102
  %v753 = vpop.f32.mrf.mxu0
  %v754 = vadd.f32 0.0, %v753
  %v755 = vpop.f32.mrf.mxu0
  %v756 = vadd.f32 0.0, %v755
  %757 = vmatmul.bf16.gmra.mxu0 %v103
  %v758 = vpop.f32.mrf.mxu0
  %v759 = vadd.f32 0.0, %v758
  %v760 = vpop.f32.mrf.mxu0
  %v761 = vadd.f32 0.0, %v760
  %762 = vmatmul.bf16.gmra.mxu0 %v104
  %v763 = vpop.f32.mrf.mxu0
  %v764 = vadd.f32 0.0, %v763
  %v765 = vpop.f32.mrf.mxu0
  %v766 = vadd.f32 0.0, %v765
  %767 = vdwg.mxu0
  %v768 = vpack.c.bf16 %v731, %v729
  %v769 = vpack.c.bf16 %v736, %v734
  %v770 = vpack.c.bf16 %v741, %v739
  %v771 = vpack.c.bf16 %v746, %v744
  %v772 = vpack.c.bf16 %v751, %v749
  %v773 = vpack.c.bf16 %v756, %v754
  %v774 = vpack.c.bf16 %v761, %v759
  %v775 = vpack.c.bf16 %v766, %v764
  %s776 = scalar_lea.vmem %s3, 3
  %v777 = vld [vmem:[%s776] sm:$0x1]
  %v779 = vperm.slane %v777, 0
  %v797 = vunpack.c.l.b16 %v703
  %v798 = vunpack.c.l.b16 %v704
  %v799 = vunpack.c.l.b16 %v705
  %v800 = vunpack.c.l.b16 %v706
  %v801 = vunpack.c.l.b16 %v707
  %v802 = vunpack.c.l.b16 %v708
  %v803 = vunpack.c.l.b16 %v709
  %v804 = vunpack.c.l.b16 %v710
  %v805 = vunpack.c.l.b16 %v711
  %v806 = vunpack.c.l.b16 %v712
  %v807 = vunpack.c.l.b16 %v713
  %v808 = vunpack.c.l.b16 %v714
  %v809 = vunpack.c.l.b16 %v715
  %v810 = vunpack.c.l.b16 %v716
  %v811 = vunpack.c.l.b16 %v717
  %v812 = vunpack.c.l.b16 %v718
  %v813 = vpack.c.b16 %v798, %v797
  %v814 = vpack.c.b16 %v800, %v799
  %v815 = vpack.c.b16 %v802, %v801
  %v816 = vpack.c.b16 %v804, %v803
  %v817 = vpack.c.b16 %v806, %v805
  %v818 = vpack.c.b16 %v808, %v807
  %v819 = vpack.c.b16 %v810, %v809
  %v820 = vpack.c.b16 %v812, %v811
  %829 = vmatpush.bf16.msra.mxu0 %v820
  %830 = vmatpush.bf16.msra.mxu0 %v819
  %831 = vmatpush.bf16.msra.mxu0 %v818
  %832 = vmatpush.bf16.msra.mxu0 %v817
  %833 = vmatpush.bf16.msra.mxu0 %v816
  %834 = vmatpush.bf16.msra.mxu0 %v815
  %835 = vmatpush.bf16.msra.mxu0 %v814
  %836 = vmatpush.bf16.msra.mxu0 %v813
  %837 = vmatmul.bf16.gmra.mxu0 %v768
  %v838 = vpop.f32.mrf.mxu0
  %v839 = vadd.f32 %v779, %v838
  %v840 = vpop.f32.mrf.mxu0
  %v841 = vadd.f32 %v779, %v840
  %842 = vmatmul.bf16.gmra.mxu0 %v769
  %v843 = vpop.f32.mrf.mxu0
  %v844 = vadd.f32 %v779, %v843
  %v845 = vpop.f32.mrf.mxu0
  %v846 = vadd.f32 %v779, %v845
  %847 = vmatmul.bf16.gmra.mxu0 %v770
  %v848 = vpop.f32.mrf.mxu0
  %v849 = vadd.f32 %v779, %v848
  %v850 = vpop.f32.mrf.mxu0
  %v851 = vadd.f32 %v779, %v850
  %852 = vmatmul.bf16.gmra.mxu0 %v771
  %v853 = vpop.f32.mrf.mxu0
  %v854 = vadd.f32 %v779, %v853
  %v855 = vpop.f32.mrf.mxu0
  %v856 = vadd.f32 %v779, %v855
  %857 = vmatmul.bf16.gmra.mxu0 %v772
  %v858 = vpop.f32.mrf.mxu0
  %v859 = vadd.f32 %v779, %v858
  %v860 = vpop.f32.mrf.mxu0
  %v861 = vadd.f32 %v779, %v860
  %862 = vmatmul.bf16.gmra.mxu0 %v773
  %v863 = vpop.f32.mrf.mxu0
  %v864 = vadd.f32 %v779, %v863
  %v865 = vpop.f32.mrf.mxu0
  %v866 = vadd.f32 %v779, %v865
  %867 = vmatmul.bf16.gmra.mxu0 %v774
  %v868 = vpop.f32.mrf.mxu0
  %v869 = vadd.f32 %v779, %v868
  %v870 = vpop.f32.mrf.mxu0
  %v871 = vadd.f32 %v779, %v870
  %872 = vmatmul.bf16.gmra.mxu0 %v775
  %v873 = vpop.f32.mrf.mxu0
  %v874 = vadd.f32 %v779, %v873
  %v875 = vpop.f32.mrf.mxu0
  %v876 = vadd.f32 %v779, %v875
  %877 = vdwg.mxu0
  %v878 = vmax.f32 %v839, 0.0
  %v879 = vmax.f32 %v841, 0.0
  %v880 = vmax.f32 %v844, 0.0
  %v881 = vmax.f32 %v846, 0.0
  %v882 = vmax.f32 %v849, 0.0
  %v883 = vmax.f32 %v851, 0.0
  %v884 = vmax.f32 %v854, 0.0
  %v885 = vmax.f32 %v856, 0.0
  %v886 = vmax.f32 %v859, 0.0
  %v887 = vmax.f32 %v861, 0.0
  %v888 = vmax.f32 %v864, 0.0
  %v889 = vmax.f32 %v866, 0.0
  %v890 = vmax.f32 %v869, 0.0
  %v891 = vmax.f32 %v871, 0.0
  %v892 = vmax.f32 %v874, 0.0
  %v893 = vmax.f32 %v876, 0.0
  %v894 = vpack.c.bf16 %v879, %v878
  %v895 = vpack.c.bf16 %v881, %v880
  %v896 = vpack.c.bf16 %v883, %v882
  %v897 = vpack.c.bf16 %v885, %v884
  %v898 = vpack.c.bf16 %v887, %v886
  %v899 = vpack.c.bf16 %v889, %v888
  %v900 = vpack.c.bf16 %v891, %v890
  %v901 = vpack.c.bf16 %v893, %v892
  %s902 = scalar_lea.vmem %s2, 256
  %v903 = vld [vmem:[%s902] sm:$0xf]
  %v904 = vld [vmem:[%s902 + $0x4] sm:$0xf]
  %v905 = vld [vmem:[%s902 + $0x8] sm:$0xf]
  %v906 = vld [vmem:[%s902 + $0xc] sm:$0xf]
  %v907 = vld [vmem:[%s902 + $0x10] sm:$0xf]
  %v908 = vld [vmem:[%s902 + $0x14] sm:$0xf]
  %v909 = vld [vmem:[%s902 + $0x18] sm:$0xf]
  %v910 = vld [vmem:[%s902 + $0x1c] sm:$0xf]
  %v911 = vld [vmem:[%s902 + $0x20] sm:$0xf]
  %v912 = vld [vmem:[%s902 + $0x24] sm:$0xf]
  %v913 = vld [vmem:[%s902 + $0x28] sm:$0xf]
  %v914 = vld [vmem:[%s902 + $0x2c] sm:$0xf]
  %v915 = vld [vmem:[%s902 + $0x30] sm:$0xf]
  %v916 = vld [vmem:[%s902 + $0x34] sm:$0xf]
  %v917 = vld [vmem:[%s902 + $0x38] sm:$0xf]
  %v918 = vld [vmem:[%s902 + $0x3c] sm:$0xf]
  %919 = vmatpush.bf16.msra.mxu0 %v901
  %920 = vmatpush.bf16.msra.mxu0 %v900
  %921 = vmatpush.bf16.msra.mxu0 %v899
  %922 = vmatpush.bf16.msra.mxu0 %v898
  %923 = vmatpush.bf16.msra.mxu0 %v897
  %924 = vmatpush.bf16.msra.mxu0 %v896
  %925 = vmatpush.bf16.msra.mxu0 %v895
  %926 = vmatpush.bf16.msra.mxu0 %v894
  %927 = vmatmul.bf16.gmra.mxu0 %v97
  %v928 = vpop.f32.mrf.mxu0
  %v929 = vadd.f32 0.0, %v928
  %v930 = vpop.f32.mrf.mxu0
  %v931 = vadd.f32 0.0, %v930
  %932 = vmatmul.bf16.gmra.mxu0 %v98
  %v933 = vpop.f32.mrf.mxu0
  %v934 = vadd.f32 0.0, %v933
  %v935 = vpop.f32.mrf.mxu0
  %v936 = vadd.f32 0.0, %v935
  %937 = vmatmul.bf16.gmra.mxu0 %v99
  %v938 = vpop.f32.mrf.mxu0
  %v939 = vadd.f32 0.0, %v938
  %v940 = vpop.f32.mrf.mxu0
  %v941 = vadd.f32 0.0, %v940
  %942 = vmatmul.bf16.gmra.mxu0 %v100
  %v943 = vpop.f32.mrf.mxu0
  %v944 = vadd.f32 0.0, %v943
  %v945 = vpop.f32.mrf.mxu0
  %v946 = vadd.f32 0.0, %v945
  %947 = vmatmul.bf16.gmra.mxu0 %v101
  %v948 = vpop.f32.mrf.mxu0
  %v949 = vadd.f32 0.0, %v948
  %v950 = vpop.f32.mrf.mxu0
  %v951 = vadd.f32 0.0, %v950
  %952 = vmatmul.bf16.gmra.mxu0 %v102
  %v953 = vpop.f32.mrf.mxu0
  %v954 = vadd.f32 0.0, %v953
  %v955 = vpop.f32.mrf.mxu0
  %v956 = vadd.f32 0.0, %v955
  %957 = vmatmul.bf16.gmra.mxu0 %v103
  %v958 = vpop.f32.mrf.mxu0
  %v959 = vadd.f32 0.0, %v958
  %v960 = vpop.f32.mrf.mxu0
  %v961 = vadd.f32 0.0, %v960
  %962 = vmatmul.bf16.gmra.mxu0 %v104
  %v963 = vpop.f32.mrf.mxu0
  %v964 = vadd.f32 0.0, %v963
  %v965 = vpop.f32.mrf.mxu0
  %v966 = vadd.f32 0.0, %v965
  %967 = vdwg.mxu0
  %v968 = vpack.c.bf16 %v931, %v929
  %v969 = vpack.c.bf16 %v936, %v934
  %v970 = vpack.c.bf16 %v941, %v939
  %v971 = vpack.c.bf16 %v946, %v944
  %v972 = vpack.c.bf16 %v951, %v949
  %v973 = vpack.c.bf16 %v956, %v954
  %v974 = vpack.c.bf16 %v961, %v959
  %v975 = vpack.c.bf16 %v966, %v964
  %s976 = scalar_lea.vmem %s3, 4
  %v977 = vld [vmem:[%s976] sm:$0x1]
  %v979 = vperm.slane %v977, 0
  %v997 = vunpack.c.l.b16 %v903
  %v998 = vunpack.c.l.b16 %v904
  %v999 = vunpack.c.l.b16 %v905
  %v1000 = vunpack.c.l.b16 %v906
  %v1001 = vunpack.c.l.b16 %v907
  %v1002 = vunpack.c.l.b16 %v908
  %v1003 = vunpack.c.l.b16 %v909
  %v1004 = vunpack.c.l.b16 %v910
  %v1005 = vunpack.c.l.b16 %v911
  %v1006 = vunpack.c.l.b16 %v912
  %v1007 = vunpack.c.l.b16 %v913
  %v1008 = vunpack.c.l.b16 %v914
  %v1009 = vunpack.c.l.b16 %v915
  %v1010 = vunpack.c.l.b16 %v916
  %v1011 = vunpack.c.l.b16 %v917
  %v1012 = vunpack.c.l.b16 %v918
  %v1013 = vpack.c.b16 %v998, %v997
  %v1014 = vpack.c.b16 %v1000, %v999
  %v1015 = vpack.c.b16 %v1002, %v1001
  %v1016 = vpack.c.b16 %v1004, %v1003
  %v1017 = vpack.c.b16 %v1006, %v1005
  %v1018 = vpack.c.b16 %v1008, %v1007
  %v1019 = vpack.c.b16 %v1010, %v1009
  %v1020 = vpack.c.b16 %v1012, %v1011
  %1029 = vmatpush.bf16.msra.mxu0 %v1020
  %1030 = vmatpush.bf16.msra.mxu0 %v1019
  %1031 = vmatpush.bf16.msra.mxu0 %v1018
  %1032 = vmatpush.bf16.msra.mxu0 %v1017
  %1033 = vmatpush.bf16.msra.mxu0 %v1016
  %1034 = vmatpush.bf16.msra.mxu0 %v1015
  %1035 = vmatpush.bf16.msra.mxu0 %v1014
  %1036 = vmatpush.bf16.msra.mxu0 %v1013
  %1037 = vmatmul.bf16.gmra.mxu0 %v968
  %v1038 = vpop.f32.mrf.mxu0
  %v1039 = vadd.f32 %v979, %v1038
  %v1040 = vpop.f32.mrf.mxu0
  %v1041 = vadd.f32 %v979, %v1040
  %1042 = vmatmul.bf16.gmra.mxu0 %v969
  %v1043 = vpop.f32.mrf.mxu0
  %v1044 = vadd.f32 %v979, %v1043
  %v1045 = vpop.f32.mrf.mxu0
  %v1046 = vadd.f32 %v979, %v1045
  %1047 = vmatmul.bf16.gmra.mxu0 %v970
  %v1048 = vpop.f32.mrf.mxu0
  %v1049 = vadd.f32 %v979, %v1048
  %v1050 = vpop.f32.mrf.mxu0
  %v1051 = vadd.f32 %v979, %v1050
  %1052 = vmatmul.bf16.gmra.mxu0 %v971
  %v1053 = vpop.f32.mrf.mxu0
  %v1054 = vadd.f32 %v979, %v1053
  %v1055 = vpop.f32.mrf.mxu0
  %v1056 = vadd.f32 %v979, %v1055
  %1057 = vmatmul.bf16.gmra.mxu0 %v972
  %v1058 = vpop.f32.mrf.mxu0
  %v1059 = vadd.f32 %v979, %v1058
  %v1060 = vpop.f32.mrf.mxu0
  %v1061 = vadd.f32 %v979, %v1060
  %1062 = vmatmul.bf16.gmra.mxu0 %v973
  %v1063 = vpop.f32.mrf.mxu0
  %v1064 = vadd.f32 %v979, %v1063
  %v1065 = vpop.f32.mrf.mxu0
  %v1066 = vadd.f32 %v979, %v1065
  %1067 = vmatmul.bf16.gmra.mxu0 %v974
  %v1068 = vpop.f32.mrf.mxu0
  %v1069 = vadd.f32 %v979, %v1068
  %v1070 = vpop.f32.mrf.mxu0
  %v1071 = vadd.f32 %v979, %v1070
  %1072 = vmatmul.bf16.gmra.mxu0 %v975
  %v1073 = vpop.f32.mrf.mxu0
  %v1074 = vadd.f32 %v979, %v1073
  %v1075 = vpop.f32.mrf.mxu0
  %v1076 = vadd.f32 %v979, %v1075
  %1077 = vdwg.mxu0
  %v1078 = vmax.f32 %v1039, 0.0
  %v1079 = vmax.f32 %v1041, 0.0
  %v1080 = vmax.f32 %v1044, 0.0
  %v1081 = vmax.f32 %v1046, 0.0
  %v1082 = vmax.f32 %v1049, 0.0
  %v1083 = vmax.f32 %v1051, 0.0
  %v1084 = vmax.f32 %v1054, 0.0
  %v1085 = vmax.f32 %v1056, 0.0
  %v1086 = vmax.f32 %v1059, 0.0
  %v1087 = vmax.f32 %v1061, 0.0
  %v1088 = vmax.f32 %v1064, 0.0
  %v1089 = vmax.f32 %v1066, 0.0
  %v1090 = vmax.f32 %v1069, 0.0
  %v1091 = vmax.f32 %v1071, 0.0
  %v1092 = vmax.f32 %v1074, 0.0
  %v1093 = vmax.f32 %v1076, 0.0
  %v1094 = vadd.f32 %v878, %v1078
  %v1095 = vadd.f32 %v879, %v1079
  %v1096 = vadd.f32 %v880, %v1080
  %v1097 = vadd.f32 %v881, %v1081
  %v1098 = vadd.f32 %v882, %v1082
  %v1099 = vadd.f32 %v883, %v1083
  %v1100 = vadd.f32 %v884, %v1084
  %v1101 = vadd.f32 %v885, %v1085
  %v1102 = vadd.f32 %v886, %v1086
  %v1103 = vadd.f32 %v887, %v1087
  %v1104 = vadd.f32 %v888, %v1088
  %v1105 = vadd.f32 %v889, %v1089
  %v1106 = vadd.f32 %v890, %v1090
  %v1107 = vadd.f32 %v891, %v1091
  %v1108 = vadd.f32 %v892, %v1092
  %v1109 = vadd.f32 %v893, %v1093
  %v1110 = vpack.c.bf16 %v1095, %v1094
  %v1111 = vpack.c.bf16 %v1097, %v1096
  %v1112 = vpack.c.bf16 %v1099, %v1098
  %v1113 = vpack.c.bf16 %v1101, %v1100
  %v1114 = vpack.c.bf16 %v1103, %v1102
  %v1115 = vpack.c.bf16 %v1105, %v1104
  %v1116 = vpack.c.bf16 %v1107, %v1106
  %v1117 = vpack.c.bf16 %v1109, %v1108
  %s1118 = scalar_lea.vmem %s2, 320
  %v1119 = vld [vmem:[%s1118] sm:$0xf]
  %v1120 = vld [vmem:[%s1118 + $0x4] sm:$0xf]
  %v1121 = vld [vmem:[%s1118 + $0x8] sm:$0xf]
  %v1122 = vld [vmem:[%s1118 + $0xc] sm:$0xf]
  %v1123 = vld [vmem:[%s1118 + $0x10] sm:$0xf]
  %v1124 = vld [vmem:[%s1118 + $0x14] sm:$0xf]
  %v1125 = vld [vmem:[%s1118 + $0x18] sm:$0xf]
  %v1126 = vld [vmem:[%s1118 + $0x1c] sm:$0xf]
  %v1127 = vld [vmem:[%s1118 + $0x20] sm:$0xf]
  %v1128 = vld [vmem:[%s1118 + $0x24] sm:$0xf]
  %v1129 = vld [vmem:[%s1118 + $0x28] sm:$0xf]
  %v1130 = vld [vmem:[%s1118 + $0x2c] sm:$0xf]
  %v1131 = vld [vmem:[%s1118 + $0x30] sm:$0xf]
  %v1132 = vld [vmem:[%s1118 + $0x34] sm:$0xf]
  %v1133 = vld [vmem:[%s1118 + $0x38] sm:$0xf]
  %v1134 = vld [vmem:[%s1118 + $0x3c] sm:$0xf]
  %s1135 = scalar_lea.vmem %s3, 5
  %v1136 = vld [vmem:[%s1135] sm:$0x1]
  %v1138 = vperm.slane %v1136, 0
  %v1156 = vunpack.c.l.b16 %v1119
  %v1157 = vunpack.c.l.b16 %v1120
  %v1158 = vunpack.c.l.b16 %v1121
  %v1159 = vunpack.c.l.b16 %v1122
  %v1160 = vunpack.c.l.b16 %v1123
  %v1161 = vunpack.c.l.b16 %v1124
  %v1162 = vunpack.c.l.b16 %v1125
  %v1163 = vunpack.c.l.b16 %v1126
  %v1164 = vunpack.c.l.b16 %v1127
  %v1165 = vunpack.c.l.b16 %v1128
  %v1166 = vunpack.c.l.b16 %v1129
  %v1167 = vunpack.c.l.b16 %v1130
  %v1168 = vunpack.c.l.b16 %v1131
  %v1169 = vunpack.c.l.b16 %v1132
  %v1170 = vunpack.c.l.b16 %v1133
  %v1171 = vunpack.c.l.b16 %v1134
  %v1172 = vpack.c.b16 %v1157, %v1156
  %v1173 = vpack.c.b16 %v1159, %v1158
  %v1174 = vpack.c.b16 %v1161, %v1160
  %v1175 = vpack.c.b16 %v1163, %v1162
  %v1176 = vpack.c.b16 %v1165, %v1164
  %v1177 = vpack.c.b16 %v1167, %v1166
  %v1178 = vpack.c.b16 %v1169, %v1168
  %v1179 = vpack.c.b16 %v1171, %v1170
  %1188 = vmatpush.bf16.msra.mxu0 %v1179
  %1189 = vmatpush.bf16.msra.mxu0 %v1178
  %1190 = vmatpush.bf16.msra.mxu0 %v1177
  %1191 = vmatpush.bf16.msra.mxu0 %v1176
  %1192 = vmatpush.bf16.msra.mxu0 %v1175
  %1193 = vmatpush.bf16.msra.mxu0 %v1174
  %1194 = vmatpush.bf16.msra.mxu0 %v1173
  %1195 = vmatpush.bf16.msra.mxu0 %v1172
  %1196 = vmatmul.bf16.gmra.mxu0 %v1110
  %v1197 = vpop.f32.mrf.mxu0
  %v1198 = vadd.f32 %v1138, %v1197
  %v1199 = vpop.f32.mrf.mxu0
  %v1200 = vadd.f32 %v1138, %v1199
  %1201 = vmatmul.bf16.gmra.mxu0 %v1111
  %v1202 = vpop.f32.mrf.mxu0
  %v1203 = vadd.f32 %v1138, %v1202
  %v1204 = vpop.f32.mrf.mxu0
  %v1205 = vadd.f32 %v1138, %v1204
  %1206 = vmatmul.bf16.gmra.mxu0 %v1112
  %v1207 = vpop.f32.mrf.mxu0
  %v1208 = vadd.f32 %v1138, %v1207
  %v1209 = vpop.f32.mrf.mxu0
  %v1210 = vadd.f32 %v1138, %v1209
  %1211 = vmatmul.bf16.gmra.mxu0 %v1113
  %v1212 = vpop.f32.mrf.mxu0
  %v1213 = vadd.f32 %v1138, %v1212
  %v1214 = vpop.f32.mrf.mxu0
  %v1215 = vadd.f32 %v1138, %v1214
  %1216 = vmatmul.bf16.gmra.mxu0 %v1114
  %v1217 = vpop.f32.mrf.mxu0
  %v1218 = vadd.f32 %v1138, %v1217
  %v1219 = vpop.f32.mrf.mxu0
  %v1220 = vadd.f32 %v1138, %v1219
  %1221 = vmatmul.bf16.gmra.mxu0 %v1115
  %v1222 = vpop.f32.mrf.mxu0
  %v1223 = vadd.f32 %v1138, %v1222
  %v1224 = vpop.f32.mrf.mxu0
  %v1225 = vadd.f32 %v1138, %v1224
  %1226 = vmatmul.bf16.gmra.mxu0 %v1116
  %v1227 = vpop.f32.mrf.mxu0
  %v1228 = vadd.f32 %v1138, %v1227
  %v1229 = vpop.f32.mrf.mxu0
  %v1230 = vadd.f32 %v1138, %v1229
  %1231 = vmatmul.bf16.gmra.mxu0 %v1117
  %v1232 = vpop.f32.mrf.mxu0
  %v1233 = vadd.f32 %v1138, %v1232
  %v1234 = vpop.f32.mrf.mxu0
  %v1235 = vadd.f32 %v1138, %v1234
  %1236 = vdwg.mxu0
  %v1237 = vmax.f32 %v1198, 0.0
  %v1238 = vmax.f32 %v1200, 0.0
  %v1239 = vmax.f32 %v1203, 0.0
  %v1240 = vmax.f32 %v1205, 0.0
  %v1241 = vmax.f32 %v1208, 0.0
  %v1242 = vmax.f32 %v1210, 0.0
  %v1243 = vmax.f32 %v1213, 0.0
  %v1244 = vmax.f32 %v1215, 0.0
  %v1245 = vmax.f32 %v1218, 0.0
  %v1246 = vmax.f32 %v1220, 0.0
  %v1247 = vmax.f32 %v1223, 0.0
  %v1248 = vmax.f32 %v1225, 0.0
  %v1249 = vmax.f32 %v1228, 0.0
  %v1250 = vmax.f32 %v1230, 0.0
  %v1251 = vmax.f32 %v1233, 0.0
  %v1252 = vmax.f32 %v1235, 0.0
  %v1253 = vadd.f32 %v678, %v1237
  %v1254 = vadd.f32 %v679, %v1238
  %v1255 = vadd.f32 %v680, %v1239
  %v1256 = vadd.f32 %v681, %v1240
  %v1257 = vadd.f32 %v682, %v1241
  %v1258 = vadd.f32 %v683, %v1242
  %v1259 = vadd.f32 %v684, %v1243
  %v1260 = vadd.f32 %v685, %v1244
  %v1261 = vadd.f32 %v686, %v1245
  %v1262 = vadd.f32 %v687, %v1246
  %v1263 = vadd.f32 %v688, %v1247
  %v1264 = vadd.f32 %v689, %v1248
  %v1265 = vadd.f32 %v690, %v1249
  %v1266 = vadd.f32 %v691, %v1250
  %v1267 = vadd.f32 %v692, %v1251
  %v1268 = vadd.f32 %v693, %v1252
  %v1269 = vpack.c.bf16 %v1254, %v1253
  %v1270 = vpack.c.bf16 %v1256, %v1255
  %v1271 = vpack.c.bf16 %v1258, %v1257
  %v1272 = vpack.c.bf16 %v1260, %v1259
  %v1273 = vpack.c.bf16 %v1262, %v1261
  %v1274 = vpack.c.bf16 %v1264, %v1263
  %v1275 = vpack.c.bf16 %v1266, %v1265
  %v1276 = vpack.c.bf16 %v1268, %v1267
  %s1277 = scalar_lea.vmem %s2, 384
  %v1278 = vld [vmem:[%s1277] sm:$0xf]
  %v1279 = vld [vmem:[%s1277 + $0x4] sm:$0xf]
  %v1280 = vld [vmem:[%s1277 + $0x8] sm:$0xf]
  %v1281 = vld [vmem:[%s1277 + $0xc] sm:$0xf]
  %v1282 = vld [vmem:[%s1277 + $0x10] sm:$0xf]
  %v1283 = vld [vmem:[%s1277 + $0x14] sm:$0xf]
  %v1284 = vld [vmem:[%s1277 + $0x18] sm:$0xf]
  %v1285 = vld [vmem:[%s1277 + $0x1c] sm:$0xf]
  %v1286 = vld [vmem:[%s1277 + $0x20] sm:$0xf]
  %v1287 = vld [vmem:[%s1277 + $0x24] sm:$0xf]
  %v1288 = vld [vmem:[%s1277 + $0x28] sm:$0xf]
  %v1289 = vld [vmem:[%s1277 + $0x2c] sm:$0xf]
  %v1290 = vld [vmem:[%s1277 + $0x30] sm:$0xf]
  %v1291 = vld [vmem:[%s1277 + $0x34] sm:$0xf]
  %v1292 = vld [vmem:[%s1277 + $0x38] sm:$0xf]
  %v1293 = vld [vmem:[%s1277 + $0x3c] sm:$0xf]
  %s1294 = scalar_lea.vmem %s3, 6
  %v1295 = vld [vmem:[%s1294] sm:$0x1]
  %v1297 = vperm.slane %v1295, 0
  %v1315 = vunpack.c.l.b16 %v1278
  %v1316 = vunpack.c.l.b16 %v1279
  %v1317 = vunpack.c.l.b16 %v1280
  %v1318 = vunpack.c.l.b16 %v1281
  %v1319 = vunpack.c.l.b16 %v1282
  %v1320 = vunpack.c.l.b16 %v1283
  %v1321 = vunpack.c.l.b16 %v1284
  %v1322 = vunpack.c.l.b16 %v1285
  %v1323 = vunpack.c.l.b16 %v1286
  %v1324 = vunpack.c.l.b16 %v1287
  %v1325 = vunpack.c.l.b16 %v1288
  %v1326 = vunpack.c.l.b16 %v1289
  %v1327 = vunpack.c.l.b16 %v1290
  %v1328 = vunpack.c.l.b16 %v1291
  %v1329 = vunpack.c.l.b16 %v1292
  %v1330 = vunpack.c.l.b16 %v1293
  %v1331 = vpack.c.b16 %v1316, %v1315
  %v1332 = vpack.c.b16 %v1318, %v1317
  %v1333 = vpack.c.b16 %v1320, %v1319
  %v1334 = vpack.c.b16 %v1322, %v1321
  %v1335 = vpack.c.b16 %v1324, %v1323
  %v1336 = vpack.c.b16 %v1326, %v1325
  %v1337 = vpack.c.b16 %v1328, %v1327
  %v1338 = vpack.c.b16 %v1330, %v1329
  %1347 = vmatpush.bf16.msra.mxu0 %v1338
  %1348 = vmatpush.bf16.msra.mxu0 %v1337
  %1349 = vmatpush.bf16.msra.mxu0 %v1336
  %1350 = vmatpush.bf16.msra.mxu0 %v1335
  %1351 = vmatpush.bf16.msra.mxu0 %v1334
  %1352 = vmatpush.bf16.msra.mxu0 %v1333
  %1353 = vmatpush.bf16.msra.mxu0 %v1332
  %1354 = vmatpush.bf16.msra.mxu0 %v1331
  %1355 = vmatmul.bf16.gmra.mxu0 %v1269
  %v1356 = vpop.f32.mrf.mxu0
  %v1357 = vadd.f32 %v1297, %v1356
  %v1358 = vpop.f32.mrf.mxu0
  %v1359 = vadd.f32 %v1297, %v1358
  %1360 = vmatmul.bf16.gmra.mxu0 %v1270
  %v1361 = vpop.f32.mrf.mxu0
  %v1362 = vadd.f32 %v1297, %v1361
  %v1363 = vpop.f32.mrf.mxu0
  %v1364 = vadd.f32 %v1297, %v1363
  %1365 = vmatmul.bf16.gmra.mxu0 %v1271
  %v1366 = vpop.f32.mrf.mxu0
  %v1367 = vadd.f32 %v1297, %v1366
  %v1368 = vpop.f32.mrf.mxu0
  %v1369 = vadd.f32 %v1297, %v1368
  %1370 = vmatmul.bf16.gmra.mxu0 %v1272
  %v1371 = vpop.f32.mrf.mxu0
  %v1372 = vadd.f32 %v1297, %v1371
  %v1373 = vpop.f32.mrf.mxu0
  %v1374 = vadd.f32 %v1297, %v1373
  %1375 = vmatmul.bf16.gmra.mxu0 %v1273
  %v1376 = vpop.f32.mrf.mxu0
  %v1377 = vadd.f32 %v1297, %v1376
  %v1378 = vpop.f32.mrf.mxu0
  %v1379 = vadd.f32 %v1297, %v1378
  %1380 = vmatmul.bf16.gmra.mxu0 %v1274
  %v1381 = vpop.f32.mrf.mxu0
  %v1382 = vadd.f32 %v1297, %v1381
  %v1383 = vpop.f32.mrf.mxu0
  %v1384 = vadd.f32 %v1297, %v1383
  %1385 = vmatmul.bf16.gmra.mxu0 %v1275
  %v1386 = vpop.f32.mrf.mxu0
  %v1387 = vadd.f32 %v1297, %v1386
  %v1388 = vpop.f32.mrf.mxu0
  %v1389 = vadd.f32 %v1297, %v1388
  %1390 = vmatmul.bf16.gmra.mxu0 %v1276
  %v1391 = vpop.f32.mrf.mxu0
  %v1392 = vadd.f32 %v1297, %v1391
  %v1393 = vpop.f32.mrf.mxu0
  %v1394 = vadd.f32 %v1297, %v1393
  %1395 = vdwg.mxu0
  %v1396 = vmax.f32 %v1357, 0.0
  %v1397 = vmax.f32 %v1359, 0.0
  %v1398 = vmax.f32 %v1362, 0.0
  %v1399 = vmax.f32 %v1364, 0.0
  %v1400 = vmax.f32 %v1367, 0.0
  %v1401 = vmax.f32 %v1369, 0.0
  %v1402 = vmax.f32 %v1372, 0.0
  %v1403 = vmax.f32 %v1374, 0.0
  %v1404 = vmax.f32 %v1377, 0.0
  %v1405 = vmax.f32 %v1379, 0.0
  %v1406 = vmax.f32 %v1382, 0.0
  %v1407 = vmax.f32 %v1384, 0.0
  %v1408 = vmax.f32 %v1387, 0.0
  %v1409 = vmax.f32 %v1389, 0.0
  %v1410 = vmax.f32 %v1392, 0.0
  %v1411 = vmax.f32 %v1394, 0.0
  %v1412 = vpack.c.bf16 %v1397, %v1396
  %v1413 = vpack.c.bf16 %v1399, %v1398
  %v1414 = vpack.c.bf16 %v1401, %v1400
  %v1415 = vpack.c.bf16 %v1403, %v1402
  %v1416 = vpack.c.bf16 %v1405, %v1404
  %v1417 = vpack.c.bf16 %v1407, %v1406
  %v1418 = vpack.c.bf16 %v1409, %v1408
  %v1419 = vpack.c.bf16 %v1411, %v1410
  %s1420 = scalar_lea.vmem %s2, 448
  %v1421 = vld [vmem:[%s1420] sm:$0xf]
  %v1422 = vld [vmem:[%s1420 + $0x4] sm:$0xf]
  %v1423 = vld [vmem:[%s1420 + $0x8] sm:$0xf]
  %v1424 = vld [vmem:[%s1420 + $0xc] sm:$0xf]
  %v1425 = vld [vmem:[%s1420 + $0x10] sm:$0xf]
  %v1426 = vld [vmem:[%s1420 + $0x14] sm:$0xf]
  %v1427 = vld [vmem:[%s1420 + $0x18] sm:$0xf]
  %v1428 = vld [vmem:[%s1420 + $0x1c] sm:$0xf]
  %v1429 = vld [vmem:[%s1420 + $0x20] sm:$0xf]
  %v1430 = vld [vmem:[%s1420 + $0x24] sm:$0xf]
  %v1431 = vld [vmem:[%s1420 + $0x28] sm:$0xf]
  %v1432 = vld [vmem:[%s1420 + $0x2c] sm:$0xf]
  %v1433 = vld [vmem:[%s1420 + $0x30] sm:$0xf]
  %v1434 = vld [vmem:[%s1420 + $0x34] sm:$0xf]
  %v1435 = vld [vmem:[%s1420 + $0x38] sm:$0xf]
  %v1436 = vld [vmem:[%s1420 + $0x3c] sm:$0xf]
  %1437 = vmatpush.bf16.msra.mxu0 %v1419
  %1438 = vmatpush.bf16.msra.mxu0 %v1418
  %1439 = vmatpush.bf16.msra.mxu0 %v1417
  %1440 = vmatpush.bf16.msra.mxu0 %v1416
  %1441 = vmatpush.bf16.msra.mxu0 %v1415
  %1442 = vmatpush.bf16.msra.mxu0 %v1414
  %1443 = vmatpush.bf16.msra.mxu0 %v1413
  %1444 = vmatpush.bf16.msra.mxu0 %v1412
  %1445 = vmatmul.bf16.gmra.mxu0 %v97
  %v1446 = vpop.f32.mrf.mxu0
  %v1447 = vadd.f32 0.0, %v1446
  %v1448 = vpop.f32.mrf.mxu0
  %v1449 = vadd.f32 0.0, %v1448
  %1450 = vmatmul.bf16.gmra.mxu0 %v98
  %v1451 = vpop.f32.mrf.mxu0
  %v1452 = vadd.f32 0.0, %v1451
  %v1453 = vpop.f32.mrf.mxu0
  %v1454 = vadd.f32 0.0, %v1453
  %1455 = vmatmul.bf16.gmra.mxu0 %v99
  %v1456 = vpop.f32.mrf.mxu0
  %v1457 = vadd.f32 0.0, %v1456
  %v1458 = vpop.f32.mrf.mxu0
  %v1459 = vadd.f32 0.0, %v1458
  %1460 = vmatmul.bf16.gmra.mxu0 %v100
  %v1461 = vpop.f32.mrf.mxu0
  %v1462 = vadd.f32 0.0, %v1461
  %v1463 = vpop.f32.mrf.mxu0
  %v1464 = vadd.f32 0.0, %v1463
  %1465 = vmatmul.bf16.gmra.mxu0 %v101
  %v1466 = vpop.f32.mrf.mxu0
  %v1467 = vadd.f32 0.0, %v1466
  %v1468 = vpop.f32.mrf.mxu0
  %v1469 = vadd.f32 0.0, %v1468
  %1470 = vmatmul.bf16.gmra.mxu0 %v102
  %v1471 = vpop.f32.mrf.mxu0
  %v1472 = vadd.f32 0.0, %v1471
  %v1473 = vpop.f32.mrf.mxu0
  %v1474 = vadd.f32 0.0, %v1473
  %1475 = vmatmul.bf16.gmra.mxu0 %v103
  %v1476 = vpop.f32.mrf.mxu0
  %v1477 = vadd.f32 0.0, %v1476
  %v1478 = vpop.f32.mrf.mxu0
  %v1479 = vadd.f32 0.0, %v1478
  %1480 = vmatmul.bf16.gmra.mxu0 %v104
  %v1481 = vpop.f32.mrf.mxu0
  %v1482 = vadd.f32 0.0, %v1481
  %v1483 = vpop.f32.mrf.mxu0
  %v1484 = vadd.f32 0.0, %v1483
  %1485 = vdwg.mxu0
  %v1486 = vpack.c.bf16 %v1449, %v1447
  %v1487 = vpack.c.bf16 %v1454, %v1452
  %v1488 = vpack.c.bf16 %v1459, %v1457
  %v1489 = vpack.c.bf16 %v1464, %v1462
  %v1490 = vpack.c.bf16 %v1469, %v1467
  %v1491 = vpack.c.bf16 %v1474, %v1472
  %v1492 = vpack.c.bf16 %v1479, %v1477
  %v1493 = vpack.c.bf16 %v1484, %v1482
  %s1494 = scalar_lea.vmem %s3, 7
  %v1495 = vld [vmem:[%s1494] sm:$0x1]
  %v1497 = vperm.slane %v1495, 0
  %v1515 = vunpack.c.l.b16 %v1421
  %v1516 = vunpack.c.l.b16 %v1422
  %v1517 = vunpack.c.l.b16 %v1423
  %v1518 = vunpack.c.l.b16 %v1424
  %v1519 = vunpack.c.l.b16 %v1425
  %v1520 = vunpack.c.l.b16 %v1426
  %v1521 = vunpack.c.l.b16 %v1427
  %v1522 = vunpack.c.l.b16 %v1428
  %v1523 = vunpack.c.l.b16 %v1429
  %v1524 = vunpack.c.l.b16 %v1430
  %v1525 = vunpack.c.l.b16 %v1431
  %v1526 = vunpack.c.l.b16 %v1432
  %v1527 = vunpack.c.l.b16 %v1433
  %v1528 = vunpack.c.l.b16 %v1434
  %v1529 = vunpack.c.l.b16 %v1435
  %v1530 = vunpack.c.l.b16 %v1436
  %v1531 = vpack.c.b16 %v1516, %v1515
  %v1532 = vpack.c.b16 %v1518, %v1517
  %v1533 = vpack.c.b16 %v1520, %v1519
  %v1534 = vpack.c.b16 %v1522, %v1521
  %v1535 = vpack.c.b16 %v1524, %v1523
  %v1536 = vpack.c.b16 %v1526, %v1525
  %v1537 = vpack.c.b16 %v1528, %v1527
  %v1538 = vpack.c.b16 %v1530, %v1529
  %1547 = vmatpush.bf16.msra.mxu0 %v1538
  %1548 = vmatpush.bf16.msra.mxu0 %v1537
  %1549 = vmatpush.bf16.msra.mxu0 %v1536
  %1550 = vmatpush.bf16.msra.mxu0 %v1535
  %1551 = vmatpush.bf16.msra.mxu0 %v1534
  %1552 = vmatpush.bf16.msra.mxu0 %v1533
  %1553 = vmatpush.bf16.msra.mxu0 %v1532
  %1554 = vmatpush.bf16.msra.mxu0 %v1531
  %1555 = vmatmul.bf16.gmra.mxu0 %v1486
  %v1556 = vpop.f32.mrf.mxu0
  %v1557 = vadd.f32 %v1497, %v1556
  %v1558 = vpop.f32.mrf.mxu0
  %v1559 = vadd.f32 %v1497, %v1558
  %1560 = vmatmul.bf16.gmra.mxu0 %v1487
  %v1561 = vpop.f32.mrf.mxu0
  %v1562 = vadd.f32 %v1497, %v1561
  %v1563 = vpop.f32.mrf.mxu0
  %v1564 = vadd.f32 %v1497, %v1563
  %1565 = vmatmul.bf16.gmra.mxu0 %v1488
  %v1566 = vpop.f32.mrf.mxu0
  %v1567 = vadd.f32 %v1497, %v1566
  %v1568 = vpop.f32.mrf.mxu0
  %v1569 = vadd.f32 %v1497, %v1568
  %1570 = vmatmul.bf16.gmra.mxu0 %v1489
  %v1571 = vpop.f32.mrf.mxu0
  %v1572 = vadd.f32 %v1497, %v1571
  %v1573 = vpop.f32.mrf.mxu0
  %v1574 = vadd.f32 %v1497, %v1573
  %1575 = vmatmul.bf16.gmra.mxu0 %v1490
  %v1576 = vpop.f32.mrf.mxu0
  %v1577 = vadd.f32 %v1497, %v1576
  %v1578 = vpop.f32.mrf.mxu0
  %v1579 = vadd.f32 %v1497, %v1578
  %1580 = vmatmul.bf16.gmra.mxu0 %v1491
  %v1581 = vpop.f32.mrf.mxu0
  %v1582 = vadd.f32 %v1497, %v1581
  %v1583 = vpop.f32.mrf.mxu0
  %v1584 = vadd.f32 %v1497, %v1583
  %1585 = vmatmul.bf16.gmra.mxu0 %v1492
  %v1586 = vpop.f32.mrf.mxu0
  %v1587 = vadd.f32 %v1497, %v1586
  %v1588 = vpop.f32.mrf.mxu0
  %v1589 = vadd.f32 %v1497, %v1588
  %1590 = vmatmul.bf16.gmra.mxu0 %v1493
  %v1591 = vpop.f32.mrf.mxu0
  %v1592 = vadd.f32 %v1497, %v1591
  %v1593 = vpop.f32.mrf.mxu0
  %v1594 = vadd.f32 %v1497, %v1593
  %1595 = vdwg.mxu0
  %v1596 = vmax.f32 %v1557, 0.0
  %v1597 = vmax.f32 %v1559, 0.0
  %v1598 = vmax.f32 %v1562, 0.0
  %v1599 = vmax.f32 %v1564, 0.0
  %v1600 = vmax.f32 %v1567, 0.0
  %v1601 = vmax.f32 %v1569, 0.0
  %v1602 = vmax.f32 %v1572, 0.0
  %v1603 = vmax.f32 %v1574, 0.0
  %v1604 = vmax.f32 %v1577, 0.0
  %v1605 = vmax.f32 %v1579, 0.0
  %v1606 = vmax.f32 %v1582, 0.0
  %v1607 = vmax.f32 %v1584, 0.0
  %v1608 = vmax.f32 %v1587, 0.0
  %v1609 = vmax.f32 %v1589, 0.0
  %v1610 = vmax.f32 %v1592, 0.0
  %v1611 = vmax.f32 %v1594, 0.0
  %v1612 = vpack.c.bf16 %v1597, %v1596
  %v1613 = vpack.c.bf16 %v1599, %v1598
  %v1614 = vpack.c.bf16 %v1601, %v1600
  %v1615 = vpack.c.bf16 %v1603, %v1602
  %v1616 = vpack.c.bf16 %v1605, %v1604
  %v1617 = vpack.c.bf16 %v1607, %v1606
  %v1618 = vpack.c.bf16 %v1609, %v1608
  %v1619 = vpack.c.bf16 %v1611, %v1610
  %s1620 = scalar_lea.vmem %s2, 512
  %v1621 = vld [vmem:[%s1620] sm:$0xf]
  %v1622 = vld [vmem:[%s1620 + $0x4] sm:$0xf]
  %v1623 = vld [vmem:[%s1620 + $0x8] sm:$0xf]
  %v1624 = vld [vmem:[%s1620 + $0xc] sm:$0xf]
  %v1625 = vld [vmem:[%s1620 + $0x10] sm:$0xf]
  %v1626 = vld [vmem:[%s1620 + $0x14] sm:$0xf]
  %v1627 = vld [vmem:[%s1620 + $0x18] sm:$0xf]
  %v1628 = vld [vmem:[%s1620 + $0x1c] sm:$0xf]
  %v1629 = vld [vmem:[%s1620 + $0x20] sm:$0xf]
  %v1630 = vld [vmem:[%s1620 + $0x24] sm:$0xf]
  %v1631 = vld [vmem:[%s1620 + $0x28] sm:$0xf]
  %v1632 = vld [vmem:[%s1620 + $0x2c] sm:$0xf]
  %v1633 = vld [vmem:[%s1620 + $0x30] sm:$0xf]
  %v1634 = vld [vmem:[%s1620 + $0x34] sm:$0xf]
  %v1635 = vld [vmem:[%s1620 + $0x38] sm:$0xf]
  %v1636 = vld [vmem:[%s1620 + $0x3c] sm:$0xf]
  %1637 = vmatpush.bf16.msra.mxu0 %v1619
  %1638 = vmatpush.bf16.msra.mxu0 %v1618
  %1639 = vmatpush.bf16.msra.mxu0 %v1617
  %1640 = vmatpush.bf16.msra.mxu0 %v1616
  %1641 = vmatpush.bf16.msra.mxu0 %v1615
  %1642 = vmatpush.bf16.msra.mxu0 %v1614
  %1643 = vmatpush.bf16.msra.mxu0 %v1613
  %1644 = vmatpush.bf16.msra.mxu0 %v1612
  %1645 = vmatmul.bf16.gmra.mxu0 %v97
  %v1646 = vpop.f32.mrf.mxu0
  %v1647 = vadd.f32 0.0, %v1646
  %v1648 = vpop.f32.mrf.mxu0
  %v1649 = vadd.f32 0.0, %v1648
  %1650 = vmatmul.bf16.gmra.mxu0 %v98
  %v1651 = vpop.f32.mrf.mxu0
  %v1652 = vadd.f32 0.0, %v1651
  %v1653 = vpop.f32.mrf.mxu0
  %v1654 = vadd.f32 0.0, %v1653
  %1655 = vmatmul.bf16.gmra.mxu0 %v99
  %v1656 = vpop.f32.mrf.mxu0
  %v1657 = vadd.f32 0.0, %v1656
  %v1658 = vpop.f32.mrf.mxu0
  %v1659 = vadd.f32 0.0, %v1658
  %1660 = vmatmul.bf16.gmra.mxu0 %v100
  %v1661 = vpop.f32.mrf.mxu0
  %v1662 = vadd.f32 0.0, %v1661
  %v1663 = vpop.f32.mrf.mxu0
  %v1664 = vadd.f32 0.0, %v1663
  %1665 = vmatmul.bf16.gmra.mxu0 %v101
  %v1666 = vpop.f32.mrf.mxu0
  %v1667 = vadd.f32 0.0, %v1666
  %v1668 = vpop.f32.mrf.mxu0
  %v1669 = vadd.f32 0.0, %v1668
  %1670 = vmatmul.bf16.gmra.mxu0 %v102
  %v1671 = vpop.f32.mrf.mxu0
  %v1672 = vadd.f32 0.0, %v1671
  %v1673 = vpop.f32.mrf.mxu0
  %v1674 = vadd.f32 0.0, %v1673
  %1675 = vmatmul.bf16.gmra.mxu0 %v103
  %v1676 = vpop.f32.mrf.mxu0
  %v1677 = vadd.f32 0.0, %v1676
  %v1678 = vpop.f32.mrf.mxu0
  %v1679 = vadd.f32 0.0, %v1678
  %1680 = vmatmul.bf16.gmra.mxu0 %v104
  %v1681 = vpop.f32.mrf.mxu0
  %v1682 = vadd.f32 0.0, %v1681
  %v1683 = vpop.f32.mrf.mxu0
  %v1684 = vadd.f32 0.0, %v1683
  %1685 = vdwg.mxu0
  %v1686 = vpack.c.bf16 %v1649, %v1647
  %v1687 = vpack.c.bf16 %v1654, %v1652
  %v1688 = vpack.c.bf16 %v1659, %v1657
  %v1689 = vpack.c.bf16 %v1664, %v1662
  %v1690 = vpack.c.bf16 %v1669, %v1667
  %v1691 = vpack.c.bf16 %v1674, %v1672
  %v1692 = vpack.c.bf16 %v1679, %v1677
  %v1693 = vpack.c.bf16 %v1684, %v1682
  %s1694 = scalar_lea.vmem %s3, 8
  %v1695 = vld [vmem:[%s1694] sm:$0x1]
  %v1697 = vperm.slane %v1695, 0
  %v1715 = vunpack.c.l.b16 %v1621
  %v1716 = vunpack.c.l.b16 %v1622
  %v1717 = vunpack.c.l.b16 %v1623
  %v1718 = vunpack.c.l.b16 %v1624
  %v1719 = vunpack.c.l.b16 %v1625
  %v1720 = vunpack.c.l.b16 %v1626
  %v1721 = vunpack.c.l.b16 %v1627
  %v1722 = vunpack.c.l.b16 %v1628
  %v1723 = vunpack.c.l.b16 %v1629
  %v1724 = vunpack.c.l.b16 %v1630
  %v1725 = vunpack.c.l.b16 %v1631
  %v1726 = vunpack.c.l.b16 %v1632
  %v1727 = vunpack.c.l.b16 %v1633
  %v1728 = vunpack.c.l.b16 %v1634
  %v1729 = vunpack.c.l.b16 %v1635
  %v1730 = vunpack.c.l.b16 %v1636
  %v1731 = vpack.c.b16 %v1716, %v1715
  %v1732 = vpack.c.b16 %v1718, %v1717
  %v1733 = vpack.c.b16 %v1720, %v1719
  %v1734 = vpack.c.b16 %v1722, %v1721
  %v1735 = vpack.c.b16 %v1724, %v1723
  %v1736 = vpack.c.b16 %v1726, %v1725
  %v1737 = vpack.c.b16 %v1728, %v1727
  %v1738 = vpack.c.b16 %v1730, %v1729
  %1747 = vmatpush.bf16.msra.mxu0 %v1738
  %1748 = vmatpush.bf16.msra.mxu0 %v1737
  %1749 = vmatpush.bf16.msra.mxu0 %v1736
  %1750 = vmatpush.bf16.msra.mxu0 %v1735
  %1751 = vmatpush.bf16.msra.mxu0 %v1734
  %1752 = vmatpush.bf16.msra.mxu0 %v1733
  %1753 = vmatpush.bf16.msra.mxu0 %v1732
  %1754 = vmatpush.bf16.msra.mxu0 %v1731
  %1755 = vmatmul.bf16.gmra.mxu0 %v1686
  %v1756 = vpop.f32.mrf.mxu0
  %v1757 = vadd.f32 %v1697, %v1756
  %v1758 = vpop.f32.mrf.mxu0
  %v1759 = vadd.f32 %v1697, %v1758
  %1760 = vmatmul.bf16.gmra.mxu0 %v1687
  %v1761 = vpop.f32.mrf.mxu0
  %v1762 = vadd.f32 %v1697, %v1761
  %v1763 = vpop.f32.mrf.mxu0
  %v1764 = vadd.f32 %v1697, %v1763
  %1765 = vmatmul.bf16.gmra.mxu0 %v1688
  %v1766 = vpop.f32.mrf.mxu0
  %v1767 = vadd.f32 %v1697, %v1766
  %v1768 = vpop.f32.mrf.mxu0
  %v1769 = vadd.f32 %v1697, %v1768
  %1770 = vmatmul.bf16.gmra.mxu0 %v1689
  %v1771 = vpop.f32.mrf.mxu0
  %v1772 = vadd.f32 %v1697, %v1771
  %v1773 = vpop.f32.mrf.mxu0
  %v1774 = vadd.f32 %v1697, %v1773
  %1775 = vmatmul.bf16.gmra.mxu0 %v1690
  %v1776 = vpop.f32.mrf.mxu0
  %v1777 = vadd.f32 %v1697, %v1776
  %v1778 = vpop.f32.mrf.mxu0
  %v1779 = vadd.f32 %v1697, %v1778
  %1780 = vmatmul.bf16.gmra.mxu0 %v1691
  %v1781 = vpop.f32.mrf.mxu0
  %v1782 = vadd.f32 %v1697, %v1781
  %v1783 = vpop.f32.mrf.mxu0
  %v1784 = vadd.f32 %v1697, %v1783
  %1785 = vmatmul.bf16.gmra.mxu0 %v1692
  %v1786 = vpop.f32.mrf.mxu0
  %v1787 = vadd.f32 %v1697, %v1786
  %v1788 = vpop.f32.mrf.mxu0
  %v1789 = vadd.f32 %v1697, %v1788
  %1790 = vmatmul.bf16.gmra.mxu0 %v1693
  %v1791 = vpop.f32.mrf.mxu0
  %v1792 = vadd.f32 %v1697, %v1791
  %v1793 = vpop.f32.mrf.mxu0
  %v1794 = vadd.f32 %v1697, %v1793
  %1795 = vdwg.mxu0
  %v1796 = vmax.f32 %v1757, 0.0
  %v1797 = vmax.f32 %v1759, 0.0
  %v1798 = vmax.f32 %v1762, 0.0
  %v1799 = vmax.f32 %v1764, 0.0
  %v1800 = vmax.f32 %v1767, 0.0
  %v1801 = vmax.f32 %v1769, 0.0
  %v1802 = vmax.f32 %v1772, 0.0
  %v1803 = vmax.f32 %v1774, 0.0
  %v1804 = vmax.f32 %v1777, 0.0
  %v1805 = vmax.f32 %v1779, 0.0
  %v1806 = vmax.f32 %v1782, 0.0
  %v1807 = vmax.f32 %v1784, 0.0
  %v1808 = vmax.f32 %v1787, 0.0
  %v1809 = vmax.f32 %v1789, 0.0
  %v1810 = vmax.f32 %v1792, 0.0
  %v1811 = vmax.f32 %v1794, 0.0
  %v1812 = vadd.f32 %v1596, %v1796
  %v1813 = vadd.f32 %v1597, %v1797
  %v1814 = vadd.f32 %v1598, %v1798
  %v1815 = vadd.f32 %v1599, %v1799
  %v1816 = vadd.f32 %v1600, %v1800
  %v1817 = vadd.f32 %v1601, %v1801
  %v1818 = vadd.f32 %v1602, %v1802
  %v1819 = vadd.f32 %v1603, %v1803
  %v1820 = vadd.f32 %v1604, %v1804
  %v1821 = vadd.f32 %v1605, %v1805
  %v1822 = vadd.f32 %v1606, %v1806
  %v1823 = vadd.f32 %v1607, %v1807
  %v1824 = vadd.f32 %v1608, %v1808
  %v1825 = vadd.f32 %v1609, %v1809
  %v1826 = vadd.f32 %v1610, %v1810
  %v1827 = vadd.f32 %v1611, %v1811
  %v1828 = vpack.c.bf16 %v1813, %v1812
  %v1829 = vpack.c.bf16 %v1815, %v1814
  %v1830 = vpack.c.bf16 %v1817, %v1816
  %v1831 = vpack.c.bf16 %v1819, %v1818
  %v1832 = vpack.c.bf16 %v1821, %v1820
  %v1833 = vpack.c.bf16 %v1823, %v1822
  %v1834 = vpack.c.bf16 %v1825, %v1824
  %v1835 = vpack.c.bf16 %v1827, %v1826
  %s1836 = scalar_lea.vmem %s2, 576
  %v1837 = vld [vmem:[%s1836] sm:$0xf]
  %v1838 = vld [vmem:[%s1836 + $0x4] sm:$0xf]
  %v1839 = vld [vmem:[%s1836 + $0x8] sm:$0xf]
  %v1840 = vld [vmem:[%s1836 + $0xc] sm:$0xf]
  %v1841 = vld [vmem:[%s1836 + $0x10] sm:$0xf]
  %v1842 = vld [vmem:[%s1836 + $0x14] sm:$0xf]
  %v1843 = vld [vmem:[%s1836 + $0x18] sm:$0xf]
  %v1844 = vld [vmem:[%s1836 + $0x1c] sm:$0xf]
  %v1845 = vld [vmem:[%s1836 + $0x20] sm:$0xf]
  %v1846 = vld [vmem:[%s1836 + $0x24] sm:$0xf]
  %v1847 = vld [vmem:[%s1836 + $0x28] sm:$0xf]
  %v1848 = vld [vmem:[%s1836 + $0x2c] sm:$0xf]
  %v1849 = vld [vmem:[%s1836 + $0x30] sm:$0xf]
  %v1850 = vld [vmem:[%s1836 + $0x34] sm:$0xf]
  %v1851 = vld [vmem:[%s1836 + $0x38] sm:$0xf]
  %v1852 = vld [vmem:[%s1836 + $0x3c] sm:$0xf]
  %s1853 = scalar_lea.vmem %s3, 9
  %v1854 = vld [vmem:[%s1853] sm:$0x1]
  %v1856 = vperm.slane %v1854, 0
  %v1874 = vunpack.c.l.b16 %v1837
  %v1875 = vunpack.c.l.b16 %v1838
  %v1876 = vunpack.c.l.b16 %v1839
  %v1877 = vunpack.c.l.b16 %v1840
  %v1878 = vunpack.c.l.b16 %v1841
  %v1879 = vunpack.c.l.b16 %v1842
  %v1880 = vunpack.c.l.b16 %v1843
  %v1881 = vunpack.c.l.b16 %v1844
  %v1882 = vunpack.c.l.b16 %v1845
  %v1883 = vunpack.c.l.b16 %v1846
  %v1884 = vunpack.c.l.b16 %v1847
  %v1885 = vunpack.c.l.b16 %v1848
  %v1886 = vunpack.c.l.b16 %v1849
  %v1887 = vunpack.c.l.b16 %v1850
  %v1888 = vunpack.c.l.b16 %v1851
  %v1889 = vunpack.c.l.b16 %v1852
  %v1890 = vpack.c.b16 %v1875, %v1874
  %v1891 = vpack.c.b16 %v1877, %v1876
  %v1892 = vpack.c.b16 %v1879, %v1878
  %v1893 = vpack.c.b16 %v1881, %v1880
  %v1894 = vpack.c.b16 %v1883, %v1882
  %v1895 = vpack.c.b16 %v1885, %v1884
  %v1896 = vpack.c.b16 %v1887, %v1886
  %v1897 = vpack.c.b16 %v1889, %v1888
  %1906 = vmatpush.bf16.msra.mxu0 %v1897
  %1907 = vmatpush.bf16.msra.mxu0 %v1896
  %1908 = vmatpush.bf16.msra.mxu0 %v1895
  %1909 = vmatpush.bf16.msra.mxu0 %v1894
  %1910 = vmatpush.bf16.msra.mxu0 %v1893
  %1911 = vmatpush.bf16.msra.mxu0 %v1892
  %1912 = vmatpush.bf16.msra.mxu0 %v1891
  %1913 = vmatpush.bf16.msra.mxu0 %v1890
  %1914 = vmatmul.bf16.gmra.mxu0 %v1828
  %v1915 = vpop.f32.mrf.mxu0
  %v1916 = vadd.f32 %v1856, %v1915
  %v1917 = vpop.f32.mrf.mxu0
  %v1918 = vadd.f32 %v1856, %v1917
  %1919 = vmatmul.bf16.gmra.mxu0 %v1829
  %v1920 = vpop.f32.mrf.mxu0
  %v1921 = vadd.f32 %v1856, %v1920
  %v1922 = vpop.f32.mrf.mxu0
  %v1923 = vadd.f32 %v1856, %v1922
  %1924 = vmatmul.bf16.gmra.mxu0 %v1830
  %v1925 = vpop.f32.mrf.mxu0
  %v1926 = vadd.f32 %v1856, %v1925
  %v1927 = vpop.f32.mrf.mxu0
  %v1928 = vadd.f32 %v1856, %v1927
  %1929 = vmatmul.bf16.gmra.mxu0 %v1831
  %v1930 = vpop.f32.mrf.mxu0
  %v1931 = vadd.f32 %v1856, %v1930
  %v1932 = vpop.f32.mrf.mxu0
  %v1933 = vadd.f32 %v1856, %v1932
  %1934 = vmatmul.bf16.gmra.mxu0 %v1832
  %v1935 = vpop.f32.mrf.mxu0
  %v1936 = vadd.f32 %v1856, %v1935
  %v1937 = vpop.f32.mrf.mxu0
  %v1938 = vadd.f32 %v1856, %v1937
  %1939 = vmatmul.bf16.gmra.mxu0 %v1833
  %v1940 = vpop.f32.mrf.mxu0
  %v1941 = vadd.f32 %v1856, %v1940
  %v1942 = vpop.f32.mrf.mxu0
  %v1943 = vadd.f32 %v1856, %v1942
  %1944 = vmatmul.bf16.gmra.mxu0 %v1834
  %v1945 = vpop.f32.mrf.mxu0
  %v1946 = vadd.f32 %v1856, %v1945
  %v1947 = vpop.f32.mrf.mxu0
  %v1948 = vadd.f32 %v1856, %v1947
  %1949 = vmatmul.bf16.gmra.mxu0 %v1835
  %v1950 = vpop.f32.mrf.mxu0
  %v1951 = vadd.f32 %v1856, %v1950
  %v1952 = vpop.f32.mrf.mxu0
  %v1953 = vadd.f32 %v1856, %v1952
  %1954 = vdwg.mxu0
  %v1955 = vmax.f32 %v1916, 0.0
  %v1956 = vmax.f32 %v1918, 0.0
  %v1957 = vmax.f32 %v1921, 0.0
  %v1958 = vmax.f32 %v1923, 0.0
  %v1959 = vmax.f32 %v1926, 0.0
  %v1960 = vmax.f32 %v1928, 0.0
  %v1961 = vmax.f32 %v1931, 0.0
  %v1962 = vmax.f32 %v1933, 0.0
  %v1963 = vmax.f32 %v1936, 0.0
  %v1964 = vmax.f32 %v1938, 0.0
  %v1965 = vmax.f32 %v1941, 0.0
  %v1966 = vmax.f32 %v1943, 0.0
  %v1967 = vmax.f32 %v1946, 0.0
  %v1968 = vmax.f32 %v1948, 0.0
  %v1969 = vmax.f32 %v1951, 0.0
  %v1970 = vmax.f32 %v1953, 0.0
  %v1971 = vpack.c.bf16 %v1956, %v1955
  %v1972 = vpack.c.bf16 %v1958, %v1957
  %v1973 = vpack.c.bf16 %v1960, %v1959
  %v1974 = vpack.c.bf16 %v1962, %v1961
  %v1975 = vpack.c.bf16 %v1964, %v1963
  %v1976 = vpack.c.bf16 %v1966, %v1965
  %v1977 = vpack.c.bf16 %v1968, %v1967
  %v1978 = vpack.c.bf16 %v1970, %v1969
  %s1979 = scalar_lea.vmem %s2, 640
  %v1980 = vld [vmem:[%s1979] sm:$0xf]
  %v1981 = vld [vmem:[%s1979 + $0x4] sm:$0xf]
  %v1982 = vld [vmem:[%s1979 + $0x8] sm:$0xf]
  %v1983 = vld [vmem:[%s1979 + $0xc] sm:$0xf]
  %v1984 = vld [vmem:[%s1979 + $0x10] sm:$0xf]
  %v1985 = vld [vmem:[%s1979 + $0x14] sm:$0xf]
  %v1986 = vld [vmem:[%s1979 + $0x18] sm:$0xf]
  %v1987 = vld [vmem:[%s1979 + $0x1c] sm:$0xf]
  %v1988 = vld [vmem:[%s1979 + $0x20] sm:$0xf]
  %v1989 = vld [vmem:[%s1979 + $0x24] sm:$0xf]
  %v1990 = vld [vmem:[%s1979 + $0x28] sm:$0xf]
  %v1991 = vld [vmem:[%s1979 + $0x2c] sm:$0xf]
  %v1992 = vld [vmem:[%s1979 + $0x30] sm:$0xf]
  %v1993 = vld [vmem:[%s1979 + $0x34] sm:$0xf]
  %v1994 = vld [vmem:[%s1979 + $0x38] sm:$0xf]
  %v1995 = vld [vmem:[%s1979 + $0x3c] sm:$0xf]
  %1996 = vmatpush.bf16.msra.mxu0 %v1978
  %1997 = vmatpush.bf16.msra.mxu0 %v1977
  %1998 = vmatpush.bf16.msra.mxu0 %v1976
  %1999 = vmatpush.bf16.msra.mxu0 %v1975
  %2000 = vmatpush.bf16.msra.mxu0 %v1974
  %2001 = vmatpush.bf16.msra.mxu0 %v1973
  %2002 = vmatpush.bf16.msra.mxu0 %v1972
  %2003 = vmatpush.bf16.msra.mxu0 %v1971
  %2004 = vmatmul.bf16.gmra.mxu0 %v97
  %v2005 = vpop.f32.mrf.mxu0
  %v2006 = vadd.f32 0.0, %v2005
  %v2007 = vpop.f32.mrf.mxu0
  %v2008 = vadd.f32 0.0, %v2007
  %2009 = vmatmul.bf16.gmra.mxu0 %v98
  %v2010 = vpop.f32.mrf.mxu0
  %v2011 = vadd.f32 0.0, %v2010
  %v2012 = vpop.f32.mrf.mxu0
  %v2013 = vadd.f32 0.0, %v2012
  %2014 = vmatmul.bf16.gmra.mxu0 %v99
  %v2015 = vpop.f32.mrf.mxu0
  %v2016 = vadd.f32 0.0, %v2015
  %v2017 = vpop.f32.mrf.mxu0
  %v2018 = vadd.f32 0.0, %v2017
  %2019 = vmatmul.bf16.gmra.mxu0 %v100
  %v2020 = vpop.f32.mrf.mxu0
  %v2021 = vadd.f32 0.0, %v2020
  %v2022 = vpop.f32.mrf.mxu0
  %v2023 = vadd.f32 0.0, %v2022
  %2024 = vmatmul.bf16.gmra.mxu0 %v101
  %v2025 = vpop.f32.mrf.mxu0
  %v2026 = vadd.f32 0.0, %v2025
  %v2027 = vpop.f32.mrf.mxu0
  %v2028 = vadd.f32 0.0, %v2027
  %2029 = vmatmul.bf16.gmra.mxu0 %v102
  %v2030 = vpop.f32.mrf.mxu0
  %v2031 = vadd.f32 0.0, %v2030
  %v2032 = vpop.f32.mrf.mxu0
  %v2033 = vadd.f32 0.0, %v2032
  %2034 = vmatmul.bf16.gmra.mxu0 %v103
  %v2035 = vpop.f32.mrf.mxu0
  %v2036 = vadd.f32 0.0, %v2035
  %v2037 = vpop.f32.mrf.mxu0
  %v2038 = vadd.f32 0.0, %v2037
  %2039 = vmatmul.bf16.gmra.mxu0 %v104
  %v2040 = vpop.f32.mrf.mxu0
  %v2041 = vadd.f32 0.0, %v2040
  %v2042 = vpop.f32.mrf.mxu0
  %v2043 = vadd.f32 0.0, %v2042
  %2044 = vdwg.mxu0
  %v2045 = vpack.c.bf16 %v2008, %v2006
  %v2046 = vpack.c.bf16 %v2013, %v2011
  %v2047 = vpack.c.bf16 %v2018, %v2016
  %v2048 = vpack.c.bf16 %v2023, %v2021
  %v2049 = vpack.c.bf16 %v2028, %v2026
  %v2050 = vpack.c.bf16 %v2033, %v2031
  %v2051 = vpack.c.bf16 %v2038, %v2036
  %v2052 = vpack.c.bf16 %v2043, %v2041
  %s2053 = scalar_lea.vmem %s3, 10
  %v2054 = vld [vmem:[%s2053] sm:$0x1]
  %v2056 = vperm.slane %v2054, 0
  %v2074 = vunpack.c.l.b16 %v1980
  %v2075 = vunpack.c.l.b16 %v1981
  %v2076 = vunpack.c.l.b16 %v1982
  %v2077 = vunpack.c.l.b16 %v1983
  %v2078 = vunpack.c.l.b16 %v1984
  %v2079 = vunpack.c.l.b16 %v1985
  %v2080 = vunpack.c.l.b16 %v1986
  %v2081 = vunpack.c.l.b16 %v1987
  %v2082 = vunpack.c.l.b16 %v1988
  %v2083 = vunpack.c.l.b16 %v1989
  %v2084 = vunpack.c.l.b16 %v1990
  %v2085 = vunpack.c.l.b16 %v1991
  %v2086 = vunpack.c.l.b16 %v1992
  %v2087 = vunpack.c.l.b16 %v1993
  %v2088 = vunpack.c.l.b16 %v1994
  %v2089 = vunpack.c.l.b16 %v1995
  %v2090 = vpack.c.b16 %v2075, %v2074
  %v2091 = vpack.c.b16 %v2077, %v2076
  %v2092 = vpack.c.b16 %v2079, %v2078
  %v2093 = vpack.c.b16 %v2081, %v2080
  %v2094 = vpack.c.b16 %v2083, %v2082
  %v2095 = vpack.c.b16 %v2085, %v2084
  %v2096 = vpack.c.b16 %v2087, %v2086
  %v2097 = vpack.c.b16 %v2089, %v2088
  %2106 = vmatpush.bf16.msra.mxu0 %v2097
  %2107 = vmatpush.bf16.msra.mxu0 %v2096
  %2108 = vmatpush.bf16.msra.mxu0 %v2095
  %2109 = vmatpush.bf16.msra.mxu0 %v2094
  %2110 = vmatpush.bf16.msra.mxu0 %v2093
  %2111 = vmatpush.bf16.msra.mxu0 %v2092
  %2112 = vmatpush.bf16.msra.mxu0 %v2091
  %2113 = vmatpush.bf16.msra.mxu0 %v2090
  %2114 = vmatmul.bf16.gmra.mxu0 %v2045
  %v2115 = vpop.f32.mrf.mxu0
  %v2116 = vadd.f32 %v2056, %v2115
  %v2117 = vpop.f32.mrf.mxu0
  %v2118 = vadd.f32 %v2056, %v2117
  %2119 = vmatmul.bf16.gmra.mxu0 %v2046
  %v2120 = vpop.f32.mrf.mxu0
  %v2121 = vadd.f32 %v2056, %v2120
  %v2122 = vpop.f32.mrf.mxu0
  %v2123 = vadd.f32 %v2056, %v2122
  %2124 = vmatmul.bf16.gmra.mxu0 %v2047
  %v2125 = vpop.f32.mrf.mxu0
  %v2126 = vadd.f32 %v2056, %v2125
  %v2127 = vpop.f32.mrf.mxu0
  %v2128 = vadd.f32 %v2056, %v2127
  %2129 = vmatmul.bf16.gmra.mxu0 %v2048
  %v2130 = vpop.f32.mrf.mxu0
  %v2131 = vadd.f32 %v2056, %v2130
  %v2132 = vpop.f32.mrf.mxu0
  %v2133 = vadd.f32 %v2056, %v2132
  %2134 = vmatmul.bf16.gmra.mxu0 %v2049
  %v2135 = vpop.f32.mrf.mxu0
  %v2136 = vadd.f32 %v2056, %v2135
  %v2137 = vpop.f32.mrf.mxu0
  %v2138 = vadd.f32 %v2056, %v2137
  %2139 = vmatmul.bf16.gmra.mxu0 %v2050
  %v2140 = vpop.f32.mrf.mxu0
  %v2141 = vadd.f32 %v2056, %v2140
  %v2142 = vpop.f32.mrf.mxu0
  %v2143 = vadd.f32 %v2056, %v2142
  %2144 = vmatmul.bf16.gmra.mxu0 %v2051
  %v2145 = vpop.f32.mrf.mxu0
  %v2146 = vadd.f32 %v2056, %v2145
  %v2147 = vpop.f32.mrf.mxu0
  %v2148 = vadd.f32 %v2056, %v2147
  %2149 = vmatmul.bf16.gmra.mxu0 %v2052
  %v2150 = vpop.f32.mrf.mxu0
  %v2151 = vadd.f32 %v2056, %v2150
  %v2152 = vpop.f32.mrf.mxu0
  %v2153 = vadd.f32 %v2056, %v2152
  %2154 = vdwg.mxu0
  %v2155 = vmax.f32 %v2116, 0.0
  %v2156 = vmax.f32 %v2118, 0.0
  %v2157 = vmax.f32 %v2121, 0.0
  %v2158 = vmax.f32 %v2123, 0.0
  %v2159 = vmax.f32 %v2126, 0.0
  %v2160 = vmax.f32 %v2128, 0.0
  %v2161 = vmax.f32 %v2131, 0.0
  %v2162 = vmax.f32 %v2133, 0.0
  %v2163 = vmax.f32 %v2136, 0.0
  %v2164 = vmax.f32 %v2138, 0.0
  %v2165 = vmax.f32 %v2141, 0.0
  %v2166 = vmax.f32 %v2143, 0.0
  %v2167 = vmax.f32 %v2146, 0.0
  %v2168 = vmax.f32 %v2148, 0.0
  %v2169 = vmax.f32 %v2151, 0.0
  %v2170 = vmax.f32 %v2153, 0.0
  %v2171 = vpack.c.bf16 %v2156, %v2155
  %v2172 = vpack.c.bf16 %v2158, %v2157
  %v2173 = vpack.c.bf16 %v2160, %v2159
  %v2174 = vpack.c.bf16 %v2162, %v2161
  %v2175 = vpack.c.bf16 %v2164, %v2163
  %v2176 = vpack.c.bf16 %v2166, %v2165
  %v2177 = vpack.c.bf16 %v2168, %v2167
  %v2178 = vpack.c.bf16 %v2170, %v2169
  %s2179 = scalar_lea.vmem %s2, 704
  %v2180 = vld [vmem:[%s2179] sm:$0xf]
  %v2181 = vld [vmem:[%s2179 + $0x4] sm:$0xf]
  %v2182 = vld [vmem:[%s2179 + $0x8] sm:$0xf]
  %v2183 = vld [vmem:[%s2179 + $0xc] sm:$0xf]
  %v2184 = vld [vmem:[%s2179 + $0x10] sm:$0xf]
  %v2185 = vld [vmem:[%s2179 + $0x14] sm:$0xf]
  %v2186 = vld [vmem:[%s2179 + $0x18] sm:$0xf]
  %v2187 = vld [vmem:[%s2179 + $0x1c] sm:$0xf]
  %v2188 = vld [vmem:[%s2179 + $0x20] sm:$0xf]
  %v2189 = vld [vmem:[%s2179 + $0x24] sm:$0xf]
  %v2190 = vld [vmem:[%s2179 + $0x28] sm:$0xf]
  %v2191 = vld [vmem:[%s2179 + $0x2c] sm:$0xf]
  %v2192 = vld [vmem:[%s2179 + $0x30] sm:$0xf]
  %v2193 = vld [vmem:[%s2179 + $0x34] sm:$0xf]
  %v2194 = vld [vmem:[%s2179 + $0x38] sm:$0xf]
  %v2195 = vld [vmem:[%s2179 + $0x3c] sm:$0xf]
  %2196 = vmatpush.bf16.msra.mxu0 %v2178
  %2197 = vmatpush.bf16.msra.mxu0 %v2177
  %2198 = vmatpush.bf16.msra.mxu0 %v2176
  %2199 = vmatpush.bf16.msra.mxu0 %v2175
  %2200 = vmatpush.bf16.msra.mxu0 %v2174
  %2201 = vmatpush.bf16.msra.mxu0 %v2173
  %2202 = vmatpush.bf16.msra.mxu0 %v2172
  %2203 = vmatpush.bf16.msra.mxu0 %v2171
  %2204 = vmatmul.bf16.gmra.mxu0 %v97
  %v2205 = vpop.f32.mrf.mxu0
  %v2206 = vadd.f32 0.0, %v2205
  %v2207 = vpop.f32.mrf.mxu0
  %v2208 = vadd.f32 0.0, %v2207
  %2209 = vmatmul.bf16.gmra.mxu0 %v98
  %v2210 = vpop.f32.mrf.mxu0
  %v2211 = vadd.f32 0.0, %v2210
  %v2212 = vpop.f32.mrf.mxu0
  %v2213 = vadd.f32 0.0, %v2212
  %2214 = vmatmul.bf16.gmra.mxu0 %v99
  %v2215 = vpop.f32.mrf.mxu0
  %v2216 = vadd.f32 0.0, %v2215
  %v2217 = vpop.f32.mrf.mxu0
  %v2218 = vadd.f32 0.0, %v2217
  %2219 = vmatmul.bf16.gmra.mxu0 %v100
  %v2220 = vpop.f32.mrf.mxu0
  %v2221 = vadd.f32 0.0, %v2220
  %v2222 = vpop.f32.mrf.mxu0
  %v2223 = vadd.f32 0.0, %v2222
  %2224 = vmatmul.bf16.gmra.mxu0 %v101
  %v2225 = vpop.f32.mrf.mxu0
  %v2226 = vadd.f32 0.0, %v2225
  %v2227 = vpop.f32.mrf.mxu0
  %v2228 = vadd.f32 0.0, %v2227
  %2229 = vmatmul.bf16.gmra.mxu0 %v102
  %v2230 = vpop.f32.mrf.mxu0
  %v2231 = vadd.f32 0.0, %v2230
  %v2232 = vpop.f32.mrf.mxu0
  %v2233 = vadd.f32 0.0, %v2232
  %2234 = vmatmul.bf16.gmra.mxu0 %v103
  %v2235 = vpop.f32.mrf.mxu0
  %v2236 = vadd.f32 0.0, %v2235
  %v2237 = vpop.f32.mrf.mxu0
  %v2238 = vadd.f32 0.0, %v2237
  %2239 = vmatmul.bf16.gmra.mxu0 %v104
  %v2240 = vpop.f32.mrf.mxu0
  %v2241 = vadd.f32 0.0, %v2240
  %v2242 = vpop.f32.mrf.mxu0
  %v2243 = vadd.f32 0.0, %v2242
  %2244 = vdwg.mxu0
  %v2245 = vpack.c.bf16 %v2208, %v2206
  %v2246 = vpack.c.bf16 %v2213, %v2211
  %v2247 = vpack.c.bf16 %v2218, %v2216
  %v2248 = vpack.c.bf16 %v2223, %v2221
  %v2249 = vpack.c.bf16 %v2228, %v2226
  %v2250 = vpack.c.bf16 %v2233, %v2231
  %v2251 = vpack.c.bf16 %v2238, %v2236
  %v2252 = vpack.c.bf16 %v2243, %v2241
  %s2253 = scalar_lea.vmem %s3, 11
  %v2254 = vld [vmem:[%s2253] sm:$0x1]
  %v2256 = vperm.slane %v2254, 0
  %v2274 = vunpack.c.l.b16 %v2180
  %v2275 = vunpack.c.l.b16 %v2181
  %v2276 = vunpack.c.l.b16 %v2182
  %v2277 = vunpack.c.l.b16 %v2183
  %v2278 = vunpack.c.l.b16 %v2184
  %v2279 = vunpack.c.l.b16 %v2185
  %v2280 = vunpack.c.l.b16 %v2186
  %v2281 = vunpack.c.l.b16 %v2187
  %v2282 = vunpack.c.l.b16 %v2188
  %v2283 = vunpack.c.l.b16 %v2189
  %v2284 = vunpack.c.l.b16 %v2190
  %v2285 = vunpack.c.l.b16 %v2191
  %v2286 = vunpack.c.l.b16 %v2192
  %v2287 = vunpack.c.l.b16 %v2193
  %v2288 = vunpack.c.l.b16 %v2194
  %v2289 = vunpack.c.l.b16 %v2195
  %v2290 = vpack.c.b16 %v2275, %v2274
  %v2291 = vpack.c.b16 %v2277, %v2276
  %v2292 = vpack.c.b16 %v2279, %v2278
  %v2293 = vpack.c.b16 %v2281, %v2280
  %v2294 = vpack.c.b16 %v2283, %v2282
  %v2295 = vpack.c.b16 %v2285, %v2284
  %v2296 = vpack.c.b16 %v2287, %v2286
  %v2297 = vpack.c.b16 %v2289, %v2288
  %2306 = vmatpush.bf16.msra.mxu0 %v2297
  %2307 = vmatpush.bf16.msra.mxu0 %v2296
  %2308 = vmatpush.bf16.msra.mxu0 %v2295
  %2309 = vmatpush.bf16.msra.mxu0 %v2294
  %2310 = vmatpush.bf16.msra.mxu0 %v2293
  %2311 = vmatpush.bf16.msra.mxu0 %v2292
  %2312 = vmatpush.bf16.msra.mxu0 %v2291
  %2313 = vmatpush.bf16.msra.mxu0 %v2290
  %2314 = vmatmul.bf16.gmra.mxu0 %v2245
  %v2315 = vpop.f32.mrf.mxu0
  %v2316 = vadd.f32 %v2256, %v2315
  %v2317 = vpop.f32.mrf.mxu0
  %v2318 = vadd.f32 %v2256, %v2317
  %2319 = vmatmul.bf16.gmra.mxu0 %v2246
  %v2320 = vpop.f32.mrf.mxu0
  %v2321 = vadd.f32 %v2256, %v2320
  %v2322 = vpop.f32.mrf.mxu0
  %v2323 = vadd.f32 %v2256, %v2322
  %2324 = vmatmul.bf16.gmra.mxu0 %v2247
  %v2325 = vpop.f32.mrf.mxu0
  %v2326 = vadd.f32 %v2256, %v2325
  %v2327 = vpop.f32.mrf.mxu0
  %v2328 = vadd.f32 %v2256, %v2327
  %2329 = vmatmul.bf16.gmra.mxu0 %v2248
  %v2330 = vpop.f32.mrf.mxu0
  %v2331 = vadd.f32 %v2256, %v2330
  %v2332 = vpop.f32.mrf.mxu0
  %v2333 = vadd.f32 %v2256, %v2332
  %2334 = vmatmul.bf16.gmra.mxu0 %v2249
  %v2335 = vpop.f32.mrf.mxu0
  %v2336 = vadd.f32 %v2256, %v2335
  %v2337 = vpop.f32.mrf.mxu0
  %v2338 = vadd.f32 %v2256, %v2337
  %2339 = vmatmul.bf16.gmra.mxu0 %v2250
  %v2340 = vpop.f32.mrf.mxu0
  %v2341 = vadd.f32 %v2256, %v2340
  %v2342 = vpop.f32.mrf.mxu0
  %v2343 = vadd.f32 %v2256, %v2342
  %2344 = vmatmul.bf16.gmra.mxu0 %v2251
  %v2345 = vpop.f32.mrf.mxu0
  %v2346 = vadd.f32 %v2256, %v2345
  %v2347 = vpop.f32.mrf.mxu0
  %v2348 = vadd.f32 %v2256, %v2347
  %2349 = vmatmul.bf16.gmra.mxu0 %v2252
  %v2350 = vpop.f32.mrf.mxu0
  %v2351 = vadd.f32 %v2256, %v2350
  %v2352 = vpop.f32.mrf.mxu0
  %v2353 = vadd.f32 %v2256, %v2352
  %2354 = vdwg.mxu0
  %v2355 = vmax.f32 %v2316, 0.0
  %v2356 = vmax.f32 %v2318, 0.0
  %v2357 = vmax.f32 %v2321, 0.0
  %v2358 = vmax.f32 %v2323, 0.0
  %v2359 = vmax.f32 %v2326, 0.0
  %v2360 = vmax.f32 %v2328, 0.0
  %v2361 = vmax.f32 %v2331, 0.0
  %v2362 = vmax.f32 %v2333, 0.0
  %v2363 = vmax.f32 %v2336, 0.0
  %v2364 = vmax.f32 %v2338, 0.0
  %v2365 = vmax.f32 %v2341, 0.0
  %v2366 = vmax.f32 %v2343, 0.0
  %v2367 = vmax.f32 %v2346, 0.0
  %v2368 = vmax.f32 %v2348, 0.0
  %v2369 = vmax.f32 %v2351, 0.0
  %v2370 = vmax.f32 %v2353, 0.0
  %v2371 = vadd.f32 %v2155, %v2355
  %v2372 = vadd.f32 %v2156, %v2356
  %v2373 = vadd.f32 %v2157, %v2357
  %v2374 = vadd.f32 %v2158, %v2358
  %v2375 = vadd.f32 %v2159, %v2359
  %v2376 = vadd.f32 %v2160, %v2360
  %v2377 = vadd.f32 %v2161, %v2361
  %v2378 = vadd.f32 %v2162, %v2362
  %v2379 = vadd.f32 %v2163, %v2363
  %v2380 = vadd.f32 %v2164, %v2364
  %v2381 = vadd.f32 %v2165, %v2365
  %v2382 = vadd.f32 %v2166, %v2366
  %v2383 = vadd.f32 %v2167, %v2367
  %v2384 = vadd.f32 %v2168, %v2368
  %v2385 = vadd.f32 %v2169, %v2369
  %v2386 = vadd.f32 %v2170, %v2370
  %v2387 = vpack.c.bf16 %v2372, %v2371
  %v2388 = vpack.c.bf16 %v2374, %v2373
  %v2389 = vpack.c.bf16 %v2376, %v2375
  %v2390 = vpack.c.bf16 %v2378, %v2377
  %v2391 = vpack.c.bf16 %v2380, %v2379
  %v2392 = vpack.c.bf16 %v2382, %v2381
  %v2393 = vpack.c.bf16 %v2384, %v2383
  %v2394 = vpack.c.bf16 %v2386, %v2385
  %s2395 = scalar_lea.vmem %s2, 768
  %v2396 = vld [vmem:[%s2395] sm:$0xf]
  %v2397 = vld [vmem:[%s2395 + $0x4] sm:$0xf]
  %v2398 = vld [vmem:[%s2395 + $0x8] sm:$0xf]
  %v2399 = vld [vmem:[%s2395 + $0xc] sm:$0xf]
  %v2400 = vld [vmem:[%s2395 + $0x10] sm:$0xf]
  %v2401 = vld [vmem:[%s2395 + $0x14] sm:$0xf]
  %v2402 = vld [vmem:[%s2395 + $0x18] sm:$0xf]
  %v2403 = vld [vmem:[%s2395 + $0x1c] sm:$0xf]
  %v2404 = vld [vmem:[%s2395 + $0x20] sm:$0xf]
  %v2405 = vld [vmem:[%s2395 + $0x24] sm:$0xf]
  %v2406 = vld [vmem:[%s2395 + $0x28] sm:$0xf]
  %v2407 = vld [vmem:[%s2395 + $0x2c] sm:$0xf]
  %v2408 = vld [vmem:[%s2395 + $0x30] sm:$0xf]
  %v2409 = vld [vmem:[%s2395 + $0x34] sm:$0xf]
  %v2410 = vld [vmem:[%s2395 + $0x38] sm:$0xf]
  %v2411 = vld [vmem:[%s2395 + $0x3c] sm:$0xf]
  %s2412 = scalar_lea.vmem %s3, 12
  %v2413 = vld [vmem:[%s2412] sm:$0x1]
  %v2415 = vperm.slane %v2413, 0
  %v2433 = vunpack.c.l.b16 %v2396
  %v2434 = vunpack.c.l.b16 %v2397
  %v2435 = vunpack.c.l.b16 %v2398
  %v2436 = vunpack.c.l.b16 %v2399
  %v2437 = vunpack.c.l.b16 %v2400
  %v2438 = vunpack.c.l.b16 %v2401
  %v2439 = vunpack.c.l.b16 %v2402
  %v2440 = vunpack.c.l.b16 %v2403
  %v2441 = vunpack.c.l.b16 %v2404
  %v2442 = vunpack.c.l.b16 %v2405
  %v2443 = vunpack.c.l.b16 %v2406
  %v2444 = vunpack.c.l.b16 %v2407
  %v2445 = vunpack.c.l.b16 %v2408
  %v2446 = vunpack.c.l.b16 %v2409
  %v2447 = vunpack.c.l.b16 %v2410
  %v2448 = vunpack.c.l.b16 %v2411
  %v2449 = vpack.c.b16 %v2434, %v2433
  %v2450 = vpack.c.b16 %v2436, %v2435
  %v2451 = vpack.c.b16 %v2438, %v2437
  %v2452 = vpack.c.b16 %v2440, %v2439
  %v2453 = vpack.c.b16 %v2442, %v2441
  %v2454 = vpack.c.b16 %v2444, %v2443
  %v2455 = vpack.c.b16 %v2446, %v2445
  %v2456 = vpack.c.b16 %v2448, %v2447
  %2465 = vmatpush.bf16.msra.mxu0 %v2456
  %2466 = vmatpush.bf16.msra.mxu0 %v2455
  %2467 = vmatpush.bf16.msra.mxu0 %v2454
  %2468 = vmatpush.bf16.msra.mxu0 %v2453
  %2469 = vmatpush.bf16.msra.mxu0 %v2452
  %2470 = vmatpush.bf16.msra.mxu0 %v2451
  %2471 = vmatpush.bf16.msra.mxu0 %v2450
  %2472 = vmatpush.bf16.msra.mxu0 %v2449
  %2473 = vmatmul.bf16.gmra.mxu0 %v2387
  %v2474 = vpop.f32.mrf.mxu0
  %v2475 = vadd.f32 %v2415, %v2474
  %v2476 = vpop.f32.mrf.mxu0
  %v2477 = vadd.f32 %v2415, %v2476
  %2478 = vmatmul.bf16.gmra.mxu0 %v2388
  %v2479 = vpop.f32.mrf.mxu0
  %v2480 = vadd.f32 %v2415, %v2479
  %v2481 = vpop.f32.mrf.mxu0
  %v2482 = vadd.f32 %v2415, %v2481
  %2483 = vmatmul.bf16.gmra.mxu0 %v2389
  %v2484 = vpop.f32.mrf.mxu0
  %v2485 = vadd.f32 %v2415, %v2484
  %v2486 = vpop.f32.mrf.mxu0
  %v2487 = vadd.f32 %v2415, %v2486
  %2488 = vmatmul.bf16.gmra.mxu0 %v2390
  %v2489 = vpop.f32.mrf.mxu0
  %v2490 = vadd.f32 %v2415, %v2489
  %v2491 = vpop.f32.mrf.mxu0
  %v2492 = vadd.f32 %v2415, %v2491
  %2493 = vmatmul.bf16.gmra.mxu0 %v2391
  %v2494 = vpop.f32.mrf.mxu0
  %v2495 = vadd.f32 %v2415, %v2494
  %v2496 = vpop.f32.mrf.mxu0
  %v2497 = vadd.f32 %v2415, %v2496
  %2498 = vmatmul.bf16.gmra.mxu0 %v2392
  %v2499 = vpop.f32.mrf.mxu0
  %v2500 = vadd.f32 %v2415, %v2499
  %v2501 = vpop.f32.mrf.mxu0
  %v2502 = vadd.f32 %v2415, %v2501
  %2503 = vmatmul.bf16.gmra.mxu0 %v2393
  %v2504 = vpop.f32.mrf.mxu0
  %v2505 = vadd.f32 %v2415, %v2504
  %v2506 = vpop.f32.mrf.mxu0
  %v2507 = vadd.f32 %v2415, %v2506
  %2508 = vmatmul.bf16.gmra.mxu0 %v2394
  %v2509 = vpop.f32.mrf.mxu0
  %v2510 = vadd.f32 %v2415, %v2509
  %v2511 = vpop.f32.mrf.mxu0
  %v2512 = vadd.f32 %v2415, %v2511
  %2513 = vdwg.mxu0
  %v2514 = vmax.f32 %v2475, 0.0
  %v2515 = vmax.f32 %v2477, 0.0
  %v2516 = vmax.f32 %v2480, 0.0
  %v2517 = vmax.f32 %v2482, 0.0
  %v2518 = vmax.f32 %v2485, 0.0
  %v2519 = vmax.f32 %v2487, 0.0
  %v2520 = vmax.f32 %v2490, 0.0
  %v2521 = vmax.f32 %v2492, 0.0
  %v2522 = vmax.f32 %v2495, 0.0
  %v2523 = vmax.f32 %v2497, 0.0
  %v2524 = vmax.f32 %v2500, 0.0
  %v2525 = vmax.f32 %v2502, 0.0
  %v2526 = vmax.f32 %v2505, 0.0
  %v2527 = vmax.f32 %v2507, 0.0
  %v2528 = vmax.f32 %v2510, 0.0
  %v2529 = vmax.f32 %v2512, 0.0
  %v2530 = vadd.f32 %v1955, %v2514
  %v2531 = vadd.f32 %v1956, %v2515
  %v2532 = vadd.f32 %v1957, %v2516
  %v2533 = vadd.f32 %v1958, %v2517
  %v2534 = vadd.f32 %v1959, %v2518
  %v2535 = vadd.f32 %v1960, %v2519
  %v2536 = vadd.f32 %v1961, %v2520
  %v2537 = vadd.f32 %v1962, %v2521
  %v2538 = vadd.f32 %v1963, %v2522
  %v2539 = vadd.f32 %v1964, %v2523
  %v2540 = vadd.f32 %v1965, %v2524
  %v2541 = vadd.f32 %v1966, %v2525
  %v2542 = vadd.f32 %v1967, %v2526
  %v2543 = vadd.f32 %v1968, %v2527
  %v2544 = vadd.f32 %v1969, %v2528
  %v2545 = vadd.f32 %v1970, %v2529
  %v2546 = vpack.c.bf16 %v2531, %v2530
  %v2547 = vpack.c.bf16 %v2533, %v2532
  %v2548 = vpack.c.bf16 %v2535, %v2534
  %v2549 = vpack.c.bf16 %v2537, %v2536
  %v2550 = vpack.c.bf16 %v2539, %v2538
  %v2551 = vpack.c.bf16 %v2541, %v2540
  %v2552 = vpack.c.bf16 %v2543, %v2542
  %v2553 = vpack.c.bf16 %v2545, %v2544
  %s2554 = scalar_lea.vmem %s2, 832
  %v2555 = vld [vmem:[%s2554] sm:$0xf]
  %v2556 = vld [vmem:[%s2554 + $0x4] sm:$0xf]
  %v2557 = vld [vmem:[%s2554 + $0x8] sm:$0xf]
  %v2558 = vld [vmem:[%s2554 + $0xc] sm:$0xf]
  %v2559 = vld [vmem:[%s2554 + $0x10] sm:$0xf]
  %v2560 = vld [vmem:[%s2554 + $0x14] sm:$0xf]
  %v2561 = vld [vmem:[%s2554 + $0x18] sm:$0xf]
  %v2562 = vld [vmem:[%s2554 + $0x1c] sm:$0xf]
  %v2563 = vld [vmem:[%s2554 + $0x20] sm:$0xf]
  %v2564 = vld [vmem:[%s2554 + $0x24] sm:$0xf]
  %v2565 = vld [vmem:[%s2554 + $0x28] sm:$0xf]
  %v2566 = vld [vmem:[%s2554 + $0x2c] sm:$0xf]
  %v2567 = vld [vmem:[%s2554 + $0x30] sm:$0xf]
  %v2568 = vld [vmem:[%s2554 + $0x34] sm:$0xf]
  %v2569 = vld [vmem:[%s2554 + $0x38] sm:$0xf]
  %v2570 = vld [vmem:[%s2554 + $0x3c] sm:$0xf]
  %s2571 = scalar_lea.vmem %s3, 13
  %v2572 = vld [vmem:[%s2571] sm:$0x1]
  %v2574 = vperm.slane %v2572, 0
  %v2592 = vunpack.c.l.b16 %v2555
  %v2593 = vunpack.c.l.b16 %v2556
  %v2594 = vunpack.c.l.b16 %v2557
  %v2595 = vunpack.c.l.b16 %v2558
  %v2596 = vunpack.c.l.b16 %v2559
  %v2597 = vunpack.c.l.b16 %v2560
  %v2598 = vunpack.c.l.b16 %v2561
  %v2599 = vunpack.c.l.b16 %v2562
  %v2600 = vunpack.c.l.b16 %v2563
  %v2601 = vunpack.c.l.b16 %v2564
  %v2602 = vunpack.c.l.b16 %v2565
  %v2603 = vunpack.c.l.b16 %v2566
  %v2604 = vunpack.c.l.b16 %v2567
  %v2605 = vunpack.c.l.b16 %v2568
  %v2606 = vunpack.c.l.b16 %v2569
  %v2607 = vunpack.c.l.b16 %v2570
  %v2608 = vpack.c.b16 %v2593, %v2592
  %v2609 = vpack.c.b16 %v2595, %v2594
  %v2610 = vpack.c.b16 %v2597, %v2596
  %v2611 = vpack.c.b16 %v2599, %v2598
  %v2612 = vpack.c.b16 %v2601, %v2600
  %v2613 = vpack.c.b16 %v2603, %v2602
  %v2614 = vpack.c.b16 %v2605, %v2604
  %v2615 = vpack.c.b16 %v2607, %v2606
  %2624 = vmatpush.bf16.msra.mxu0 %v2615
  %2625 = vmatpush.bf16.msra.mxu0 %v2614
  %2626 = vmatpush.bf16.msra.mxu0 %v2613
  %2627 = vmatpush.bf16.msra.mxu0 %v2612
  %2628 = vmatpush.bf16.msra.mxu0 %v2611
  %2629 = vmatpush.bf16.msra.mxu0 %v2610
  %2630 = vmatpush.bf16.msra.mxu0 %v2609
  %2631 = vmatpush.bf16.msra.mxu0 %v2608
  %2632 = vmatmul.bf16.gmra.mxu0 %v2546
  %v2633 = vpop.f32.mrf.mxu0
  %v2634 = vadd.f32 %v2574, %v2633
  %v2635 = vpop.f32.mrf.mxu0
  %v2636 = vadd.f32 %v2574, %v2635
  %2637 = vmatmul.bf16.gmra.mxu0 %v2547
  %v2638 = vpop.f32.mrf.mxu0
  %v2639 = vadd.f32 %v2574, %v2638
  %v2640 = vpop.f32.mrf.mxu0
  %v2641 = vadd.f32 %v2574, %v2640
  %2642 = vmatmul.bf16.gmra.mxu0 %v2548
  %v2643 = vpop.f32.mrf.mxu0
  %v2644 = vadd.f32 %v2574, %v2643
  %v2645 = vpop.f32.mrf.mxu0
  %v2646 = vadd.f32 %v2574, %v2645
  %2647 = vmatmul.bf16.gmra.mxu0 %v2549
  %v2648 = vpop.f32.mrf.mxu0
  %v2649 = vadd.f32 %v2574, %v2648
  %v2650 = vpop.f32.mrf.mxu0
  %v2651 = vadd.f32 %v2574, %v2650
  %2652 = vmatmul.bf16.gmra.mxu0 %v2550
  %v2653 = vpop.f32.mrf.mxu0
  %v2654 = vadd.f32 %v2574, %v2653
  %v2655 = vpop.f32.mrf.mxu0
  %v2656 = vadd.f32 %v2574, %v2655
  %2657 = vmatmul.bf16.gmra.mxu0 %v2551
  %v2658 = vpop.f32.mrf.mxu0
  %v2659 = vadd.f32 %v2574, %v2658
  %v2660 = vpop.f32.mrf.mxu0
  %v2661 = vadd.f32 %v2574, %v2660
  %2662 = vmatmul.bf16.gmra.mxu0 %v2552
  %v2663 = vpop.f32.mrf.mxu0
  %v2664 = vadd.f32 %v2574, %v2663
  %v2665 = vpop.f32.mrf.mxu0
  %v2666 = vadd.f32 %v2574, %v2665
  %2667 = vmatmul.bf16.gmra.mxu0 %v2553
  %v2668 = vpop.f32.mrf.mxu0
  %v2669 = vadd.f32 %v2574, %v2668
  %v2670 = vpop.f32.mrf.mxu0
  %v2671 = vadd.f32 %v2574, %v2670
  %2672 = vdwg.mxu0
  %v2673 = vadd.f32 %v1396, %v2634
  %v2674 = vadd.f32 %v1397, %v2636
  %v2675 = vadd.f32 %v1398, %v2639
  %v2676 = vadd.f32 %v1399, %v2641
  %v2677 = vadd.f32 %v1400, %v2644
  %v2678 = vadd.f32 %v1401, %v2646
  %v2679 = vadd.f32 %v1402, %v2649
  %v2680 = vadd.f32 %v1403, %v2651
  %v2681 = vadd.f32 %v1404, %v2654
  %v2682 = vadd.f32 %v1405, %v2656
  %v2683 = vadd.f32 %v1406, %v2659
  %v2684 = vadd.f32 %v1407, %v2661
  %v2685 = vadd.f32 %v1408, %v2664
  %v2686 = vadd.f32 %v1409, %v2666
  %v2687 = vadd.f32 %v1410, %v2669
  %v2688 = vadd.f32 %v1411, %v2671
  %v2689 = vpack.c.bf16 %v2674, %v2673
  %v2690 = vpack.c.bf16 %v2676, %v2675
  %v2691 = vpack.c.bf16 %v2678, %v2677
  %v2692 = vpack.c.bf16 %v2680, %v2679
  %v2693 = vpack.c.bf16 %v2682, %v2681
  %v2694 = vpack.c.bf16 %v2684, %v2683
  %v2695 = vpack.c.bf16 %v2686, %v2685
  %v2696 = vpack.c.bf16 %v2688, %v2687
  %s2697 = scalar_lea.vmem %s2, 896
  %v2698 = vld [vmem:[%s2697] sm:$0xf]
  %v2699 = vld [vmem:[%s2697 + $0x4] sm:$0xf]
  %v2700 = vld [vmem:[%s2697 + $0x8] sm:$0xf]
  %v2701 = vld [vmem:[%s2697 + $0xc] sm:$0xf]
  %v2702 = vld [vmem:[%s2697 + $0x10] sm:$0xf]
  %v2703 = vld [vmem:[%s2697 + $0x14] sm:$0xf]
  %v2704 = vld [vmem:[%s2697 + $0x18] sm:$0xf]
  %v2705 = vld [vmem:[%s2697 + $0x1c] sm:$0xf]
  %v2706 = vld [vmem:[%s2697 + $0x20] sm:$0xf]
  %v2707 = vld [vmem:[%s2697 + $0x24] sm:$0xf]
  %v2708 = vld [vmem:[%s2697 + $0x28] sm:$0xf]
  %v2709 = vld [vmem:[%s2697 + $0x2c] sm:$0xf]
  %v2710 = vld [vmem:[%s2697 + $0x30] sm:$0xf]
  %v2711 = vld [vmem:[%s2697 + $0x34] sm:$0xf]
  %v2712 = vld [vmem:[%s2697 + $0x38] sm:$0xf]
  %v2713 = vld [vmem:[%s2697 + $0x3c] sm:$0xf]
  %s2714 = scalar_lea.vmem %s3, 14
  %v2715 = vld [vmem:[%s2714] sm:$0x1]
  %v2717 = vperm.slane %v2715, 0
  %v2735 = vunpack.c.l.b16 %v2698
  %v2736 = vunpack.c.l.b16 %v2699
  %v2737 = vunpack.c.l.b16 %v2700
  %v2738 = vunpack.c.l.b16 %v2701
  %v2739 = vunpack.c.l.b16 %v2702
  %v2740 = vunpack.c.l.b16 %v2703
  %v2741 = vunpack.c.l.b16 %v2704
  %v2742 = vunpack.c.l.b16 %v2705
  %v2743 = vunpack.c.l.b16 %v2706
  %v2744 = vunpack.c.l.b16 %v2707
  %v2745 = vunpack.c.l.b16 %v2708
  %v2746 = vunpack.c.l.b16 %v2709
  %v2747 = vunpack.c.l.b16 %v2710
  %v2748 = vunpack.c.l.b16 %v2711
  %v2749 = vunpack.c.l.b16 %v2712
  %v2750 = vunpack.c.l.b16 %v2713
  %v2751 = vpack.c.b16 %v2736, %v2735
  %v2752 = vpack.c.b16 %v2738, %v2737
  %v2753 = vpack.c.b16 %v2740, %v2739
  %v2754 = vpack.c.b16 %v2742, %v2741
  %v2755 = vpack.c.b16 %v2744, %v2743
  %v2756 = vpack.c.b16 %v2746, %v2745
  %v2757 = vpack.c.b16 %v2748, %v2747
  %v2758 = vpack.c.b16 %v2750, %v2749
  %2767 = vmatpush.bf16.msra.mxu0 %v2758
  %2768 = vmatpush.bf16.msra.mxu0 %v2757
  %2769 = vmatpush.bf16.msra.mxu0 %v2756
  %2770 = vmatpush.bf16.msra.mxu0 %v2755
  %2771 = vmatpush.bf16.msra.mxu0 %v2754
  %2772 = vmatpush.bf16.msra.mxu0 %v2753
  %2773 = vmatpush.bf16.msra.mxu0 %v2752
  %2774 = vmatpush.bf16.msra.mxu0 %v2751
  %2775 = vmatmul.bf16.gmra.mxu0 %v2689
  %v2776 = vpop.f32.mrf.mxu0
  %v2777 = vadd.f32 %v2717, %v2776
  %v2778 = vpop.f32.mrf.mxu0
  %v2779 = vadd.f32 %v2717, %v2778
  %2780 = vmatmul.bf16.gmra.mxu0 %v2690
  %v2781 = vpop.f32.mrf.mxu0
  %v2782 = vadd.f32 %v2717, %v2781
  %v2783 = vpop.f32.mrf.mxu0
  %v2784 = vadd.f32 %v2717, %v2783
  %2785 = vmatmul.bf16.gmra.mxu0 %v2691
  %v2786 = vpop.f32.mrf.mxu0
  %v2787 = vadd.f32 %v2717, %v2786
  %v2788 = vpop.f32.mrf.mxu0
  %v2789 = vadd.f32 %v2717, %v2788
  %2790 = vmatmul.bf16.gmra.mxu0 %v2692
  %v2791 = vpop.f32.mrf.mxu0
  %v2792 = vadd.f32 %v2717, %v2791
  %v2793 = vpop.f32.mrf.mxu0
  %v2794 = vadd.f32 %v2717, %v2793
  %2795 = vmatmul.bf16.gmra.mxu0 %v2693
  %v2796 = vpop.f32.mrf.mxu0
  %v2797 = vadd.f32 %v2717, %v2796
  %v2798 = vpop.f32.mrf.mxu0
  %v2799 = vadd.f32 %v2717, %v2798
  %2800 = vmatmul.bf16.gmra.mxu0 %v2694
  %v2801 = vpop.f32.mrf.mxu0
  %v2802 = vadd.f32 %v2717, %v2801
  %v2803 = vpop.f32.mrf.mxu0
  %v2804 = vadd.f32 %v2717, %v2803
  %2805 = vmatmul.bf16.gmra.mxu0 %v2695
  %v2806 = vpop.f32.mrf.mxu0
  %v2807 = vadd.f32 %v2717, %v2806
  %v2808 = vpop.f32.mrf.mxu0
  %v2809 = vadd.f32 %v2717, %v2808
  %2810 = vmatmul.bf16.gmra.mxu0 %v2696
  %v2811 = vpop.f32.mrf.mxu0
  %v2812 = vadd.f32 %v2717, %v2811
  %v2813 = vpop.f32.mrf.mxu0
  %v2814 = vadd.f32 %v2717, %v2813
  %2815 = vdwg.mxu0
  %2816 = vst [vmem:[%s4] sm:$0xff] %v2777
  %2817 = vst [vmem:[%s4 + $0x8] sm:$0xff] %v2779
  %2818 = vst [vmem:[%s4 + $0x10] sm:$0xff] %v2782
  %2819 = vst [vmem:[%s4 + $0x18] sm:$0xff] %v2784
  %2820 = vst [vmem:[%s4 + $0x20] sm:$0xff] %v2787
  %2821 = vst [vmem:[%s4 + $0x28] sm:$0xff] %v2789
  %2822 = vst [vmem:[%s4 + $0x30] sm:$0xff] %v2792
  %2823 = vst [vmem:[%s4 + $0x38] sm:$0xff] %v2794
  %2824 = vst [vmem:[%s4 + $0x40] sm:$0xff] %v2797
  %2825 = vst [vmem:[%s4 + $0x48] sm:$0xff] %v2799
  %2826 = vst [vmem:[%s4 + $0x50] sm:$0xff] %v2802
  %2827 = vst [vmem:[%s4 + $0x58] sm:$0xff] %v2804
  %2828 = vst [vmem:[%s4 + $0x60] sm:$0xff] %v2807
  %2829 = vst [vmem:[%s4 + $0x68] sm:$0xff] %v2809
  %2830 = vst [vmem:[%s4 + $0x70] sm:$0xff] %v2812
  %2831 = vst [vmem:[%s4 + $0x78] sm:$0xff] %v2814
  // Predicated region
  $region18: #{block_hla8_pallas.1} parent=0 // pred_check
    _
  $region19: #{block_hla8_pallas.1} parent=0 // pred_check_branch
    %2833 = sbr.rel (0) target = $region21
  $region20: #{block_hla8_pallas.1} parent=0 // pred_region
    _
  $region21: #{block_hla8_pallas.1} parent=0 // pred_fallthru
    _
  // Predicated region
  $region22: #{block_hla8_pallas.1} parent=0 // pred_check
    _
  $region23: #{block_hla8_pallas.1} parent=0 // pred_check_branch
    %2835 = sbr.rel (0) target = $region25
  $region24: #{block_hla8_pallas.1} parent=0 // pred_region
    _
  $region25: #{block_hla8_pallas.1} parent=0 // pred_fallthru
    _

</llo_original>
